<compile_context>
chip_gen: v5e
topology: v5e:2x2
jax: 0.10.0
libtpu: 0.0.40
codegen_flags: <defaults>
</compile_context>

<pallas_src>
import functools

import jax
import jax.numpy as jnp
import numpy as np
from jax import lax
from jax.experimental import pallas as pl
from jax.experimental.pallas import tpu as pltpu

N_SUB = 8  # fixed RK4 substeps for each [0, 1] integration


def _ode_rnn_kernel(xh_ref, bias_ref, whh_ref, wode_ref, out_ref, h_ref):
    """One (batch-tile, time-chunk) piece of the ODE-RNN recurrence.

    xh_ref  : (TC, TB, H)  precomputed x @ Wxh + b_rnn
    bias_ref: (TC, TB, H)  precomputed b_ode + t * u_ode
    whh_ref : (H, H)       RNN hidden weights
    wode_ref: (H, H)       ODE derivative weights
    out_ref : (TC, TB, H)  h_ode[chunk_start + 1 + i], i in [0, TC)
    h_ref   : (TB, H)      VMEM scratch carrying h_ode across time chunks
    """
    t_chunk = xh_ref.shape[0]
    tb, _ = h_ref.shape

    # ic=None -> zero initial hidden state; reset at the first time chunk of
    # every batch tile (time is the innermost, "arbitrary" grid axis).
    @pl.when(pl.program_id(1) == 0)
    def _():
        h_ref[...] = jnp.zeros_like(h_ref)

    h_sub = 1.0 / N_SUB
    # Full unroll only for small batch tiles; big tiles already feed the MXU
    # well per matmul and a full 8x unroll would spill the 64-vreg file.
    unroll_rk4 = True if tb <= 32 else 2

    def time_step(i, h_prev):
        # RNN cell: h_rnn = tanh(x_i @ Wxh + b_rnn + h_prev @ Whh)
        # (x @ Wxh + b_rnn was hoisted off the serial critical path -> wrapper.)
        h_rnn = jnp.tanh(
            xh_ref[i]
            + jnp.dot(h_prev, whh_ref[...], preferred_element_type=jnp.float32))

        ode_bias = bias_ref[i]  # b_ode + t_i * u_ode, precomputed per step

        def df(h):
            return jnp.tanh(
                jnp.dot(h, wode_ref[...], preferred_element_type=jnp.float32)
                + ode_bias)

        def rk4(_, h):
            # Incremental RK4 combine: only {h, acc, k, probe} stay live,
            # instead of {h, k1, k2, k3, k4}.
            k = df(h)                          # k1
            acc = h + (h_sub / 6.0) * k
            k = df(h + (0.5 * h_sub) * k)      # k2
            acc = acc + (h_sub / 3.0) * k
            k = df(h + (0.5 * h_sub) * k)      # k3
            acc = acc + (h_sub / 3.0) * k
            k = df(h + h_sub * k)              # k4
            return acc + (h_sub / 6.0) * k

        h_ode = lax.fori_loop(0, N_SUB, rk4, h_rnn, unroll=unroll_rk4)
        out_ref[i] = h_ode  # lane-dense store (H is a multiple of 128)
        return h_ode

    # The time recurrence is inherently serial -> plain (non-unrolled) loop.
    h_ref[...] = lax.fori_loop(0, t_chunk, time_step, h_ref[...])


def _round_up(v, m):
    return (v + m - 1) // m * m


def _on_two_core_chip():
    """True on chips with 2 TensorCores per chip (v7x-class)."""
    try:
        kind = jax.devices()[0].device_kind.lower()
    except Exception:
        return False
    return ("v7" in kind) or ("7x" in kind)


@functools.partial(jax.jit, static_argnames=("block_b", "t_chunk"))
def ode_rnn_forward(t, x, params, *, block_b=None, t_chunk=None):
    """ODE_RNN.forward (default branch): t [T,B], x [T,B,C] -> h_ode [T+1,B,H]."""
    w_xh, w_hh, b_rnn, w_ode, u_ode, b_ode = params
    n_t, n_b = t.shape
    h_dim = w_hh.shape[0]
    hp = jax.lax.Precision.HIGHEST

    # ---- batch tiling --------------------------------------------------------
    b_pad = _round_up(n_b, 8)
    if block_b is None:
        # One tile covering the whole (padded) batch: the recurrence is serial,
        # so extra batch tiles on a 1-TC chip only re-run the loop with
        # smaller, latency-dominated matmuls.
        block_b = min(128, b_pad)
        # v7x has 2 TensorCores: give each core a balanced batch tile.
        if _on_two_core_chip() and b_pad > 8 and b_pad // block_b < 2:
            block_b = max(8, _round_up(b_pad // 2, 8))
    block_b = max(8, min(_round_up(block_b, 8), b_pad))
    b_pad = _round_up(b_pad, block_b)
    n_btiles = b_pad // block_b

    # ---- time chunking (bounds VMEM for long sequences) ----------------------
    if t_chunk is None:
        t_chunk = n_t if n_t <= 64 else 32
    t_chunk = max(1, min(t_chunk, n_t))
    t_pad = _round_up(n_t, t_chunk)
    n_tchunks = t_pad // t_chunk

    # ---- hoisted, parallel precompute (off the serial critical path) --------
    # Everything stays f32 (v5e has no bf16 VPU/EUP; matmuls accumulate f32).
    t_f = jnp.pad(t.astype(jnp.float32), ((0, t_pad - n_t), (0, b_pad - n_b)))
    x_f = jnp.pad(x.astype(jnp.float32),
                  ((0, t_pad - n_t), (0, b_pad - n_b), (0, 0)))
    w_xh = w_xh.astype(jnp.float32)
    w_hh = w_hh.astype(jnp.float32)
    w_ode = w_ode.astype(jnp.float32)
    b_rnn = b_rnn.astype(jnp.float32)
    u_ode = u_ode.astype(jnp.float32)
    b_ode = b_ode.astype(jnp.float32)

    # x @ Wxh + b_rnn for all steps at once (one big MXU-friendly matmul).
    xh = (jnp.einsum("tbc,ch->tbh", x_f, w_xh, precision=hp)
          + b_rnn[None, None, :])
    # Time-conditioned ODE bias b_ode + t * u_ode for all steps at once.
    ode_bias = b_ode[None, None, :] + t_f[:, :, None] * u_ode[None, None, :]

    # ---- VMEM budget & scheduler cost hint -----------------------------------
    blk_bytes = t_chunk * block_b * h_dim * 4
    vmem_need = (3 * 2 * blk_bytes               # xh, bias, out (double-buffered)
                 + 2 * 2 * h_dim * h_dim * 4     # weights (double-buffered)
                 + block_b * h_dim * 4)          # h carry scratch
    vmem_limit = int(min(64 * 2 ** 20, max(32 * 2 ** 20, 2 * vmem_need)))

    matmuls_per_step = 1 + 4 * N_SUB
    cost = pl.CostEstimate(
        flops=int(t_pad * b_pad * matmuls_per_step * 2 * h_dim * h_dim),
        transcendentals=int(t_pad * b_pad * matmuls_per_step * h_dim),
        bytes_accessed=int(4 * (3 * t_pad * b_pad * h_dim + 2 * h_dim * h_dim)),
    )

    out_core = pl.pallas_call(
        _ode_rnn_kernel,
        out_shape=jax.ShapeDtypeStruct((t_pad, b_pad, h_dim), jnp.float32),
        grid=(n_btiles, n_tchunks),
        in_specs=[
            pl.BlockSpec((t_chunk, block_b, h_dim), lambda b, tc: (tc, b, 0)),
            pl.BlockSpec((t_chunk, block_b, h_dim), lambda b, tc: (tc, b, 0)),
            pl.BlockSpec((h_dim, h_dim), lambda b, tc: (0, 0)),
            pl.BlockSpec((h_dim, h_dim), lambda b, tc: (0, 0)),
        ],
        out_specs=pl.BlockSpec((t_chunk, block_b, h_dim),
                               lambda b, tc: (tc, b, 0)),
        scratch_shapes=[pltpu.VMEM((block_b, h_dim), jnp.float32)],
        compiler_params=pltpu.CompilerParams(
            dimension_semantics=("parallel", "arbitrary"),
            vmem_limit_bytes=vmem_limit),
        cost_estimate=cost,
    )(xh, ode_bias, w_hh, w_ode)

    # h_ode[0] = 0 (ic=None); h_ode[1:] come from the kernel.
    h0 = jnp.zeros((1, n_b, h_dim), jnp.float32)
    return jnp.concatenate([h0, out_core[:n_t, :n_b, :]], axis=0)


def ode_rnn_forward_ref(t, x, params):
    """Plain-JAX reference of the same recurrence / fixed-step RK4 integration."""
    w_xh, w_hh, b_rnn, w_ode, u_ode, b_ode = params
    n_t, n_b = t.shape
    h_dim = w_hh.shape[0]
    hp = jax.lax.Precision.HIGHEST
    h = jnp.zeros((n_b, h_dim), jnp.float32)
    outs = [h]
    h_sub = 1.0 / N_SUB
    for i in range(n_t):
        h_rnn = jnp.tanh(jnp.dot(x[i], w_xh, precision=hp)
                         + jnp.dot(h, w_hh, precision=hp)
                         + b_rnn[None, :])
        ode_bias = b_ode[None, :] + t[i][:, None] * u_ode[None, :]

        def df(hh, ode_bias=ode_bias):
            return jnp.tanh(jnp.dot(hh, w_ode, precision=hp) + ode_bias)

        hh = h_rnn
        for _ in range(N_SUB):
            k1 = df(hh)
            k2 = df(hh + 0.5 * h_sub * k1)
            k3 = df(hh + 0.5 * h_sub * k2)
            k4 = df(hh + h_sub * k3)
            hh = hh + (h_sub / 6.0) * (k1 + 2.0 * k2 + 2.0 * k3 + k4)
        h = hh
        outs.append(h)
    return jnp.stack(outs, axis=0)


if __name__ == "__main__":
    # seq=8, batch=32, input channels=32, nhid=128 (lane-dense hidden dim)
    T, B, C, H = 8, 32, 32, 128
    key = jax.random.PRNGKey(0)
    ks = jax.random.split(key, 8)

    x = jax.random.normal(ks[0], (T, B, C), jnp.float32)
    t = (jnp.broadcast_to(jnp.linspace(0.0, 1.0, T)[:, None], (T, B))
         + 0.05 * jax.random.normal(ks[1], (T, B), jnp.float32))

    # deterministic synthetic RNN-cell and ODE-derivative parameters
    w_xh = jax.random.normal(ks[2], (C, H), jnp.float32) / jnp.sqrt(C)
    w_hh = jax.random.normal(ks[3], (H, H), jnp.float32) / jnp.sqrt(H)
    b_rnn = 0.1 * jax.random.normal(ks[4], (H,), jnp.float32)
    w_ode = jax.random.normal(ks[5], (H, H), jnp.float32) / jnp.sqrt(H)
    u_ode = 0.5 * jax.random.normal(ks[6], (H,), jnp.float32)
    b_ode = 0.1 * jax.random.normal(ks[7], (H,), jnp.float32)
    params = (w_xh, w_hh, b_rnn, w_ode, u_ode, b_ode)

    ref = ode_rnn_forward_ref(t, x, params)

    # Primary (performance) configuration: one batch tile covering the whole
    # batch, whole sequence resident (single time chunk at this size).
    out = ode_rnn_forward(t, x, params)
    jax.block_until_ready(out)
    assert out.shape == (T + 1, B, H)
    np.testing.assert_allclose(np.asarray(out), np.asarray(ref),
                               rtol=2e-3, atol=2e-3)

    # Correctness-only check of the tiled path (multiple batch tiles on the
    # "parallel" grid axis + time-chunked scratch carry). NOT a perf config.
    out_tiled = ode_rnn_forward(t, x, params, block_b=16, t_chunk=4)
    jax.block_until_ready(out_tiled)
    np.testing.assert_allclose(np.asarray(out_tiled), np.asarray(ref),
                               rtol=2e-3, atol=2e-3)

    print("KERNEL_OK")
</pallas_src>

<mosaic_0001>
module attributes {stable_mosaic.version = 11 : i64} {
  func.func @_ode_rnn_kernel(%arg0: i32, %arg1: i32, %arg2: memref<8x32x128xf32, #tpu.memory_space<vmem>>, %arg3: memref<8x32x128xf32, #tpu.memory_space<vmem>>, %arg4: memref<128x128xf32, #tpu.memory_space<vmem>>, %arg5: memref<128x128xf32, #tpu.memory_space<vmem>>, %arg6: memref<8x32x128xf32, #tpu.memory_space<vmem>>, %arg7: memref<32x128xf32, #tpu.memory_space<vmem>>) attributes {dimension_semantics = [#tpu.dimension_semantics<parallel>, #tpu.dimension_semantics<arbitrary>], iteration_bounds = array<i64: 1, 1>, scalar_prefetch = 0 : i64, scratch_operands = 1 : i64, tpu.core_type = #tpu.core_type<tc>, window_params = [{transform_indices = @transform_0, window_bounds = array<i64: 8, 32, 128>}, {transform_indices = @transform_1, window_bounds = array<i64: 8, 32, 128>}, {pipeline_mode = #tpu.pipeline_mode<synchronous>, transform_indices = @transform_2, window_bounds = array<i64: 128, 128>}, {pipeline_mode = #tpu.pipeline_mode<synchronous>, transform_indices = @transform_3, window_bounds = array<i64: 128, 128>}, {transform_indices = @transform_4, window_bounds = array<i64: 8, 32, 128>}]} {
    %c0_i32 = arith.constant 0 : i32
    %0 = arith.cmpi eq, %arg1, %c0_i32 : i32
    %1 = arith.extui %0 : i1 to i32
    %c0_i32_0 = arith.constant 0 : i32
    %2 = arith.cmpi ne, %1, %c0_i32_0 : i32
    scf.if %2 {
      %cst = arith.constant 0.000000e+00 : f32
      %7 = vector.broadcast %cst : f32 to vector<32x128xf32>
      %c0_6 = arith.constant 0 : index
      %c0_7 = arith.constant 0 : index
      %8 = vector.load %arg7[%c0_6, %c0_7] : memref<32x128xf32, #tpu.memory_space<vmem>>, vector<32x128xf32>
      tpu.vector_store %arg7[%c0_6, %c0_7], %7 {strides = array<i32>} : memref<32x128xf32, #tpu.memory_space<vmem>>, vector<32x128xf32>,
    } else {
    }
    %c0 = arith.constant 0 : index
    %c0_1 = arith.constant 0 : index
    %3 = vector.load %arg7[%c0, %c0_1] : memref<32x128xf32, #tpu.memory_space<vmem>>, vector<32x128xf32>
    %c0_i32_2 = arith.constant 0 : i32
    %c8_i32 = arith.constant 8 : i32
    %4 = arith.addi %c0_i32_2, %c8_i32 : i32
    %c1_i32 = arith.constant 1 : i32
    %5 = scf.for %arg8 = %c0_i32_2 to %4 step %c1_i32 iter_args(%arg9 = %3) -> (vector<32x128xf32>)  : i32 {
      %7 = arith.index_cast %arg8 : i32 to index
      %c0_6 = arith.constant 0 : index
      %c0_7 = arith.constant 0 : index
      %8 = vector.load %arg2[%7, %c0_6, %c0_7] : memref<8x32x128xf32, #tpu.memory_space<vmem>>, vector<1x32x128xf32>
      %9 = vector.shape_cast %8 : vector<1x32x128xf32> to vector<32x128xf32>
      %c0_8 = arith.constant 0 : index
      %c0_9 = arith.constant 0 : index
      %10 = vector.load %arg4[%c0_8, %c0_9] : memref<128x128xf32, #tpu.memory_space<vmem>>, vector<128x128xf32>
      %cst = arith.constant dense<0.000000e+00> : vector<32x128xf32>
      %11 = tpu.matmul %arg9, %10, %cst {dimension_numbers = #tpu.dot_dimension_numbers<[1], [0], [0], [1], [0, 0, 1, 1], [], []>} : vector<32x128xf32>, vector<128x128xf32>, vector<32x128xf32> -> vector<32x128xf32>
      %12 = arith.addf %9, %11 : vector<32x128xf32>
      %13 = math.tanh %12 : vector<32x128xf32>
      %14 = arith.index_cast %arg8 : i32 to index
      %c0_10 = arith.constant 0 : index
      %c0_11 = arith.constant 0 : index
      %15 = vector.load %arg3[%14, %c0_10, %c0_11] : memref<8x32x128xf32, #tpu.memory_space<vmem>>, vector<1x32x128xf32>
      %16 = vector.shape_cast %15 : vector<1x32x128xf32> to vector<32x128xf32>
      %c0_i32_12 = arith.constant 0 : i32
      %c0_13 = arith.constant 0 : index
      %c0_14 = arith.constant 0 : index
      %17 = vector.load %arg5[%c0_13, %c0_14] : memref<128x128xf32, #tpu.memory_space<vmem>>, vector<128x128xf32>
      %cst_15 = arith.constant dense<0.000000e+00> : vector<32x128xf32>
      %18 = tpu.matmul %13, %17, %cst_15 {dimension_numbers = #tpu.dot_dimension_numbers<[1], [0], [0], [1], [0, 0, 1, 1], [], []>} : vector<32x128xf32>, vector<128x128xf32>, vector<32x128xf32> -> vector<32x128xf32>
      %19 = arith.addf %18, %16 : vector<32x128xf32>
      %20 = math.tanh %19 : vector<32x128xf32>
      %cst_16 = arith.constant 0.020833334 : f32
      %21 = vector.broadcast %cst_16 : f32 to vector<32x128xf32>
      %22 = arith.mulf %21, %20 : vector<32x128xf32>
      %23 = arith.addf %13, %22 : vector<32x128xf32>
      %cst_17 = arith.constant 6.250000e-02 : f32
      %24 = vector.broadcast %cst_17 : f32 to vector<32x128xf32>
      %25 = arith.mulf %24, %20 : vector<32x128xf32>
      %26 = arith.addf %13, %25 : vector<32x128xf32>
      %c0_18 = arith.constant 0 : index
      %c0_19 = arith.constant 0 : index
      %27 = vector.load %arg5[%c0_18, %c0_19] : memref<128x128xf32, #tpu.memory_space<vmem>>, vector<128x128xf32>
      %cst_20 = arith.constant dense<0.000000e+00> : vector<32x128xf32>
      %28 = tpu.matmul %26, %27, %cst_20 {dimension_numbers = #tpu.dot_dimension_numbers<[1], [0], [0], [1], [0, 0, 1, 1], [], []>} : vector<32x128xf32>, vector<128x128xf32>, vector<32x128xf32> -> vector<32x128xf32>
      %29 = arith.addf %28, %16 : vector<32x128xf32>
      %30 = math.tanh %29 : vector<32x128xf32>
      %cst_21 = arith.constant 0.0416666679 : f32
      %31 = vector.broadcast %cst_21 : f32 to vector<32x128xf32>
      %32 = arith.mulf %31, %30 : vector<32x128xf32>
      %33 = arith.addf %23, %32 : vector<32x128xf32>
      %cst_22 = arith.constant 6.250000e-02 : f32
      %34 = vector.broadcast %cst_22 : f32 to vector<32x128xf32>
      %35 = arith.mulf %34, %30 : vector<32x128xf32>
      %36 = arith.addf %13, %35 : vector<32x128xf32>
      %c0_23 = arith.constant 0 : index
      %c0_24 = arith.constant 0 : index
      %37 = vector.load %arg5[%c0_23, %c0_24] : memref<128x128xf32, #tpu.memory_space<vmem>>, vector<128x128xf32>
      %cst_25 = arith.constant dense<0.000000e+00> : vector<32x128xf32>
      %38 = tpu.matmul %36, %37, %cst_25 {dimension_numbers = #tpu.dot_dimension_numbers<[1], [0], [0], [1], [0, 0, 1, 1], [], []>} : vector<32x128xf32>, vector<128x128xf32>, vector<32x128xf32> -> vector<32x128xf32>
      %39 = arith.addf %38, %16 : vector<32x128xf32>
      %40 = math.tanh %39 : vector<32x128xf32>
      %cst_26 = arith.constant 0.0416666679 : f32
      %41 = vector.broadcast %cst_26 : f32 to vector<32x128xf32>
      %42 = arith.mulf %41, %40 : vector<32x128xf32>
      %43 = arith.addf %33, %42 : vector<32x128xf32>
      %cst_27 = arith.constant 1.250000e-01 : f32
      %44 = vector.broadcast %cst_27 : f32 to vector<32x128xf32>
      %45 = arith.mulf %44, %40 : vector<32x128xf32>
      %46 = arith.addf %13, %45 : vector<32x128xf32>
      %c0_28 = arith.constant 0 : index
      %c0_29 = arith.constant 0 : index
      %47 = vector.load %arg5[%c0_28, %c0_29] : memref<128x128xf32, #tpu.memory_space<vmem>>, vector<128x128xf32>
      %cst_30 = arith.constant dense<0.000000e+00> : vector<32x128xf32>
      %48 = tpu.matmul %46, %47, %cst_30 {dimension_numbers = #tpu.dot_dimension_numbers<[1], [0], [0], [1], [0, 0, 1, 1], [], []>} : vector<32x128xf32>, vector<128x128xf32>, vector<32x128xf32> -> vector<32x128xf32>
      %49 = arith.addf %48, %16 : vector<32x128xf32>
      %50 = math.tanh %49 : vector<32x128xf32>
      %cst_31 = arith.constant 0.020833334 : f32
      %51 = vector.broadcast %cst_31 : f32 to vector<32x128xf32>
      %52 = arith.mulf %51, %50 : vector<32x128xf32>
      %53 = arith.addf %43, %52 : vector<32x128xf32>
      %c1_i32_32 = arith.constant 1 : i32
      %c0_33 = arith.constant 0 : index
      %c0_34 = arith.constant 0 : index
      %54 = vector.load %arg5[%c0_33, %c0_34] : memref<128x128xf32, #tpu.memory_space<vmem>>, vector<128x128xf32>
      %cst_35 = arith.constant dense<0.000000e+00> : vector<32x128xf32>
      %55 = tpu.matmul %53, %54, %cst_35 {dimension_numbers = #tpu.dot_dimension_numbers<[1], [0], [0], [1], [0, 0, 1, 1], [], []>} : vector<32x128xf32>, vector<128x128xf32>, vector<32x128xf32> -> vector<32x128xf32>
      %56 = arith.addf %55, %16 : vector<32x128xf32>
      %57 = math.tanh %56 : vector<32x128xf32>
      %cst_36 = arith.constant 0.020833334 : f32
      %58 = vector.broadcast %cst_36 : f32 to vector<32x128xf32>
      %59 = arith.mulf %58, %57 : vector<32x128xf32>
      %60 = arith.addf %53, %59 : vector<32x128xf32>
      %cst_37 = arith.constant 6.250000e-02 : f32
      %61 = vector.broadcast %cst_37 : f32 to vector<32x128xf32>
      %62 = arith.mulf %61, %57 : vector<32x128xf32>
      %63 = arith.addf %53, %62 : vector<32x128xf32>
      %c0_38 = arith.constant 0 : index
      %c0_39 = arith.constant 0 : index
      %64 = vector.load %arg5[%c0_38, %c0_39] : memref<128x128xf32, #tpu.memory_space<vmem>>, vector<128x128xf32>
      %cst_40 = arith.constant dense<0.000000e+00> : vector<32x128xf32>
      %65 = tpu.matmul %63, %64, %cst_40 {dimension_numbers = #tpu.dot_dimension_numbers<[1], [0], [0], [1], [0, 0, 1, 1], [], []>} : vector<32x128xf32>, vector<128x128xf32>, vector<32x128xf32> -> vector<32x128xf32>
      %66 = arith.addf %65, %16 : vector<32x128xf32>
      %67 = math.tanh %66 : vector<32x128xf32>
      %cst_41 = arith.constant 0.0416666679 : f32
      %68 = vector.broadcast %cst_41 : f32 to vector<32x128xf32>
      %69 = arith.mulf %68, %67 : vector<32x128xf32>
      %70 = arith.addf %60, %69 : vector<32x128xf32>
      %cst_42 = arith.constant 6.250000e-02 : f32
      %71 = vector.broadcast %cst_42 : f32 to vector<32x128xf32>
      %72 = arith.mulf %71, %67 : vector<32x128xf32>
      %73 = arith.addf %53, %72 : vector<32x128xf32>
      %c0_43 = arith.constant 0 : index
      %c0_44 = arith.constant 0 : index
      %74 = vector.load %arg5[%c0_43, %c0_44] : memref<128x128xf32, #tpu.memory_space<vmem>>, vector<128x128xf32>
      %cst_45 = arith.constant dense<0.000000e+00> : vector<32x128xf32>
      %75 = tpu.matmul %73, %74, %cst_45 {dimension_numbers = #tpu.dot_dimension_numbers<[1], [0], [0], [1], [0, 0, 1, 1], [], []>} : vector<32x128xf32>, vector<128x128xf32>, vector<32x128xf32> -> vector<32x128xf32>
      %76 = arith.addf %75, %16 : vector<32x128xf32>
      %77 = math.tanh %76 : vector<32x128xf32>
      %cst_46 = arith.constant 0.0416666679 : f32
      %78 = vector.broadcast %cst_46 : f32 to vector<32x128xf32>
      %79 = arith.mulf %78, %77 : vector<32x128xf32>
      %80 = arith.addf %70, %79 : vector<32x128xf32>
      %cst_47 = arith.constant 1.250000e-01 : f32
      %81 = vector.broadcast %cst_47 : f32 to vector<32x128xf32>
      %82 = arith.mulf %81, %77 : vector<32x128xf32>
      %83 = arith.addf %53, %82 : vector<32x128xf32>
      %c0_48 = arith.constant 0 : index
      %c0_49 = arith.constant 0 : index
      %84 = vector.load %arg5[%c0_48, %c0_49] : memref<128x128xf32, #tpu.memory_space<vmem>>, vector<128x128xf32>
      %cst_50 = arith.constant dense<0.000000e+00> : vector<32x128xf32>
      %85 = tpu.matmul %83, %84, %cst_50 {dimension_numbers = #tpu.dot_dimension_numbers<[1], [0], [0], [1], [0, 0, 1, 1], [], []>} : vector<32x128xf32>, vector<128x128xf32>, vector<32x128xf32> -> vector<32x128xf32>
      %86 = arith.addf %85, %16 : vector<32x128xf32>
      %87 = math.tanh %86 : vector<32x128xf32>
      %cst_51 = arith.constant 0.020833334 : f32
      %88 = vector.broadcast %cst_51 : f32 to vector<32x128xf32>
      %89 = arith.mulf %88, %87 : vector<32x128xf32>
      %90 = arith.addf %80, %89 : vector<32x128xf32>
      %c2_i32 = arith.constant 2 : i32
      %c0_52 = arith.constant 0 : index
      %c0_53 = arith.constant 0 : index
      %91 = vector.load %arg5[%c0_52, %c0_53] : memref<128x128xf32, #tpu.memory_space<vmem>>, vector<128x128xf32>
      %cst_54 = arith.constant dense<0.000000e+00> : vector<32x128xf32>
      %92 = tpu.matmul %90, %91, %cst_54 {dimension_numbers = #tpu.dot_dimension_numbers<[1], [0], [0], [1], [0, 0, 1, 1], [], []>} : vector<32x128xf32>, vector<128x128xf32>, vector<32x128xf32> -> vector<32x128xf32>
      %93 = arith.addf %92, %16 : vector<32x128xf32>
      %94 = math.tanh %93 : vector<32x128xf32>
      %cst_55 = arith.constant 0.020833334 : f32
      %95 = vector.broadcast %cst_55 : f32 to vector<32x128xf32>
      %96 = arith.mulf %95, %94 : vector<32x128xf32>
      %97 = arith.addf %90, %96 : vector<32x128xf32>
      %cst_56 = arith.constant 6.250000e-02 : f32
      %98 = vector.broadcast %cst_56 : f32 to vector<32x128xf32>
      %99 = arith.mulf %98, %94 : vector<32x128xf32>
      %100 = arith.addf %90, %99 : vector<32x128xf32>
      %c0_57 = arith.constant 0 : index
      %c0_58 = arith.constant 0 : index
      %101 = vector.load %arg5[%c0_57, %c0_58] : memref<128x128xf32, #tpu.memory_space<vmem>>, vector<128x128xf32>
      %cst_59 = arith.constant dense<0.000000e+00> : vector<32x128xf32>
      %102 = tpu.matmul %100, %101, %cst_59 {dimension_numbers = #tpu.dot_dimension_numbers<[1], [0], [0], [1], [0, 0, 1, 1], [], []>} : vector<32x128xf32>, vector<128x128xf32>, vector<32x128xf32> -> vector<32x128xf32>
      %103 = arith.addf %102, %16 : vector<32x128xf32>
      %104 = math.tanh %103 : vector<32x128xf32>
      %cst_60 = arith.constant 0.0416666679 : f32
      %105 = vector.broadcast %cst_60 : f32 to vector<32x128xf32>
      %106 = arith.mulf %105, %104 : vector<32x128xf32>
      %107 = arith.addf %97, %106 : vector<32x128xf32>
      %cst_61 = arith.constant 6.250000e-02 : f32
      %108 = vector.broadcast %cst_61 : f32 to vector<32x128xf32>
      %109 = arith.mulf %108, %104 : vector<32x128xf32>
      %110 = arith.addf %90, %109 : vector<32x128xf32>
      %c0_62 = arith.constant 0 : index
      %c0_63 = arith.constant 0 : index
      %111 = vector.load %arg5[%c0_62, %c0_63] : memref<128x128xf32, #tpu.memory_space<vmem>>, vector<128x128xf32>
      %cst_64 = arith.constant dense<0.000000e+00> : vector<32x128xf32>
      %112 = tpu.matmul %110, %111, %cst_64 {dimension_numbers = #tpu.dot_dimension_numbers<[1], [0], [0], [1], [0, 0, 1, 1], [], []>} : vector<32x128xf32>, vector<128x128xf32>, vector<32x128xf32> -> vector<32x128xf32>
      %113 = arith.addf %112, %16 : vector<32x128xf32>
      %114 = math.tanh %113 : vector<32x128xf32>
      %cst_65 = arith.constant 0.0416666679 : f32
      %115 = vector.broadcast %cst_65 : f32 to vector<32x128xf32>
      %116 = arith.mulf %115, %114 : vector<32x128xf32>
      %117 = arith.addf %107, %116 : vector<32x128xf32>
      %cst_66 = arith.constant 1.250000e-01 : f32
      %118 = vector.broadcast %cst_66 : f32 to vector<32x128xf32>
      %119 = arith.mulf %118, %114 : vector<32x128xf32>
      %120 = arith.addf %90, %119 : vector<32x128xf32>
      %c0_67 = arith.constant 0 : index
      %c0_68 = arith.constant 0 : index
      %121 = vector.load %arg5[%c0_67, %c0_68] : memref<128x128xf32, #tpu.memory_space<vmem>>, vector<128x128xf32>
      %cst_69 = arith.constant dense<0.000000e+00> : vector<32x128xf32>
      %122 = tpu.matmul %120, %121, %cst_69 {dimension_numbers = #tpu.dot_dimension_numbers<[1], [0], [0], [1], [0, 0, 1, 1], [], []>} : vector<32x128xf32>, vector<128x128xf32>, vector<32x128xf32> -> vector<32x128xf32>
      %123 = arith.addf %122, %16 : vector<32x128xf32>
      %124 = math.tanh %123 : vector<32x128xf32>
      %cst_70 = arith.constant 0.020833334 : f32
      %125 = vector.broadcast %cst_70 : f32 to vector<32x128xf32>
      %126 = arith.mulf %125, %124 : vector<32x128xf32>
      %127 = arith.addf %117, %126 : vector<32x128xf32>
      %c3_i32 = arith.constant 3 : i32
      %c0_71 = arith.constant 0 : index
      %c0_72 = arith.constant 0 : index
      %128 = vector.load %arg5[%c0_71, %c0_72] : memref<128x128xf32, #tpu.memory_space<vmem>>, vector<128x128xf32>
      %cst_73 = arith.constant dense<0.000000e+00> : vector<32x128xf32>
      %129 = tpu.matmul %127, %128, %cst_73 {dimension_numbers = #tpu.dot_dimension_numbers<[1], [0], [0], [1], [0, 0, 1, 1], [], []>} : vector<32x128xf32>, vector<128x128xf32>, vector<32x128xf32> -> vector<32x128xf32>
      %130 = arith.addf %129, %16 : vector<32x128xf32>
      %131 = math.tanh %130 : vector<32x128xf32>
      %cst_74 = arith.constant 0.020833334 : f32
      %132 = vector.broadcast %cst_74 : f32 to vector<32x128xf32>
      %133 = arith.mulf %132, %131 : vector<32x128xf32>
      %134 = arith.addf %127, %133 : vector<32x128xf32>
      %cst_75 = arith.constant 6.250000e-02 : f32
      %135 = vector.broadcast %cst_75 : f32 to vector<32x128xf32>
      %136 = arith.mulf %135, %131 : vector<32x128xf32>
      %137 = arith.addf %127, %136 : vector<32x128xf32>
      %c0_76 = arith.constant 0 : index
      %c0_77 = arith.constant 0 : index
      %138 = vector.load %arg5[%c0_76, %c0_77] : memref<128x128xf32, #tpu.memory_space<vmem>>, vector<128x128xf32>
      %cst_78 = arith.constant dense<0.000000e+00> : vector<32x128xf32>
      %139 = tpu.matmul %137, %138, %cst_78 {dimension_numbers = #tpu.dot_dimension_numbers<[1], [0], [0], [1], [0, 0, 1, 1], [], []>} : vector<32x128xf32>, vector<128x128xf32>, vector<32x128xf32> -> vector<32x128xf32>
      %140 = arith.addf %139, %16 : vector<32x128xf32>
      %141 = math.tanh %140 : vector<32x128xf32>
      %cst_79 = arith.constant 0.0416666679 : f32
      %142 = vector.broadcast %cst_79 : f32 to vector<32x128xf32>
      %143 = arith.mulf %142, %141 : vector<32x128xf32>
      %144 = arith.addf %134, %143 : vector<32x128xf32>
      %cst_80 = arith.constant 6.250000e-02 : f32
      %145 = vector.broadcast %cst_80 : f32 to vector<32x128xf32>
      %146 = arith.mulf %145, %141 : vector<32x128xf32>
      %147 = arith.addf %127, %146 : vector<32x128xf32>
      %c0_81 = arith.constant 0 : index
      %c0_82 = arith.constant 0 : index
      %148 = vector.load %arg5[%c0_81, %c0_82] : memref<128x128xf32, #tpu.memory_space<vmem>>, vector<128x128xf32>
      %cst_83 = arith.constant dense<0.000000e+00> : vector<32x128xf32>
      %149 = tpu.matmul %147, %148, %cst_83 {dimension_numbers = #tpu.dot_dimension_numbers<[1], [0], [0], [1], [0, 0, 1, 1], [], []>} : vector<32x128xf32>, vector<128x128xf32>, vector<32x128xf32> -> vector<32x128xf32>
      %150 = arith.addf %149, %16 : vector<32x128xf32>
      %151 = math.tanh %150 : vector<32x128xf32>
      %cst_84 = arith.constant 0.0416666679 : f32
      %152 = vector.broadcast %cst_84 : f32 to vector<32x128xf32>
      %153 = arith.mulf %152, %151 : vector<32x128xf32>
      %154 = arith.addf %144, %153 : vector<32x128xf32>
      %cst_85 = arith.constant 1.250000e-01 : f32
      %155 = vector.broadcast %cst_85 : f32 to vector<32x128xf32>
      %156 = arith.mulf %155, %151 : vector<32x128xf32>
      %157 = arith.addf %127, %156 : vector<32x128xf32>
      %c0_86 = arith.constant 0 : index
      %c0_87 = arith.constant 0 : index
      %158 = vector.load %arg5[%c0_86, %c0_87] : memref<128x128xf32, #tpu.memory_space<vmem>>, vector<128x128xf32>
      %cst_88 = arith.constant dense<0.000000e+00> : vector<32x128xf32>
      %159 = tpu.matmul %157, %158, %cst_88 {dimension_numbers = #tpu.dot_dimension_numbers<[1], [0], [0], [1], [0, 0, 1, 1], [], []>} : vector<32x128xf32>, vector<128x128xf32>, vector<32x128xf32> -> vector<32x128xf32>
      %160 = arith.addf %159, %16 : vector<32x128xf32>
      %161 = math.tanh %160 : vector<32x128xf32>
      %cst_89 = arith.constant 0.020833334 : f32
      %162 = vector.broadcast %cst_89 : f32 to vector<32x128xf32>
      %163 = arith.mulf %162, %161 : vector<32x128xf32>
      %164 = arith.addf %154, %163 : vector<32x128xf32>
      %c4_i32 = arith.constant 4 : i32
      %c0_90 = arith.constant 0 : index
      %c0_91 = arith.constant 0 : index
      %165 = vector.load %arg5[%c0_90, %c0_91] : memref<128x128xf32, #tpu.memory_space<vmem>>, vector<128x128xf32>
      %cst_92 = arith.constant dense<0.000000e+00> : vector<32x128xf32>
      %166 = tpu.matmul %164, %165, %cst_92 {dimension_numbers = #tpu.dot_dimension_numbers<[1], [0], [0], [1], [0, 0, 1, 1], [], []>} : vector<32x128xf32>, vector<128x128xf32>, vector<32x128xf32> -> vector<32x128xf32>
      %167 = arith.addf %166, %16 : vector<32x128xf32>
      %168 = math.tanh %167 : vector<32x128xf32>
      %cst_93 = arith.constant 0.020833334 : f32
      %169 = vector.broadcast %cst_93 : f32 to vector<32x128xf32>
      %170 = arith.mulf %169, %168 : vector<32x128xf32>
      %171 = arith.addf %164, %170 : vector<32x128xf32>
      %cst_94 = arith.constant 6.250000e-02 : f32
      %172 = vector.broadcast %cst_94 : f32 to vector<32x128xf32>
      %173 = arith.mulf %172, %168 : vector<32x128xf32>
      %174 = arith.addf %164, %173 : vector<32x128xf32>
      %c0_95 = arith.constant 0 : index
      %c0_96 = arith.constant 0 : index
      %175 = vector.load %arg5[%c0_95, %c0_96] : memref<128x128xf32, #tpu.memory_space<vmem>>, vector<128x128xf32>
      %cst_97 = arith.constant dense<0.000000e+00> : vector<32x128xf32>
      %176 = tpu.matmul %174, %175, %cst_97 {dimension_numbers = #tpu.dot_dimension_numbers<[1], [0], [0], [1], [0, 0, 1, 1], [], []>} : vector<32x128xf32>, vector<128x128xf32>, vector<32x128xf32> -> vector<32x128xf32>
      %177 = arith.addf %176, %16 : vector<32x128xf32>
      %178 = math.tanh %177 : vector<32x128xf32>
      %cst_98 = arith.constant 0.0416666679 : f32
      %179 = vector.broadcast %cst_98 : f32 to vector<32x128xf32>
      %180 = arith.mulf %179, %178 : vector<32x128xf32>
      %181 = arith.addf %171, %180 : vector<32x128xf32>
      %cst_99 = arith.constant 6.250000e-02 : f32
      %182 = vector.broadcast %cst_99 : f32 to vector<32x128xf32>
      %183 = arith.mulf %182, %178 : vector<32x128xf32>
      %184 = arith.addf %164, %183 : vector<32x128xf32>
      %c0_100 = arith.constant 0 : index
      %c0_101 = arith.constant 0 : index
      %185 = vector.load %arg5[%c0_100, %c0_101] : memref<128x128xf32, #tpu.memory_space<vmem>>, vector<128x128xf32>
      %cst_102 = arith.constant dense<0.000000e+00> : vector<32x128xf32>
      %186 = tpu.matmul %184, %185, %cst_102 {dimension_numbers = #tpu.dot_dimension_numbers<[1], [0], [0], [1], [0, 0, 1, 1], [], []>} : vector<32x128xf32>, vector<128x128xf32>, vector<32x128xf32> -> vector<32x128xf32>
      %187 = arith.addf %186, %16 : vector<32x128xf32>
      %188 = math.tanh %187 : vector<32x128xf32>
      %cst_103 = arith.constant 0.0416666679 : f32
      %189 = vector.broadcast %cst_103 : f32 to vector<32x128xf32>
      %190 = arith.mulf %189, %188 : vector<32x128xf32>
      %191 = arith.addf %181, %190 : vector<32x128xf32>
      %cst_104 = arith.constant 1.250000e-01 : f32
      %192 = vector.broadcast %cst_104 : f32 to vector<32x128xf32>
      %193 = arith.mulf %192, %188 : vector<32x128xf32>
      %194 = arith.addf %164, %193 : vector<32x128xf32>
      %c0_105 = arith.constant 0 : index
      %c0_106 = arith.constant 0 : index
      %195 = vector.load %arg5[%c0_105, %c0_106] : memref<128x128xf32, #tpu.memory_space<vmem>>, vector<128x128xf32>
      %cst_107 = arith.constant dense<0.000000e+00> : vector<32x128xf32>
      %196 = tpu.matmul %194, %195, %cst_107 {dimension_numbers = #tpu.dot_dimension_numbers<[1], [0], [0], [1], [0, 0, 1, 1], [], []>} : vector<32x128xf32>, vector<128x128xf32>, vector<32x128xf32> -> vector<32x128xf32>
      %197 = arith.addf %196, %16 : vector<32x128xf32>
      %198 = math.tanh %197 : vector<32x128xf32>
      %cst_108 = arith.constant 0.020833334 : f32
      %199 = vector.broadcast %cst_108 : f32 to vector<32x128xf32>
      %200 = arith.mulf %199, %198 : vector<32x128xf32>
      %201 = arith.addf %191, %200 : vector<32x128xf32>
      %c5_i32 = arith.constant 5 : i32
      %c0_109 = arith.constant 0 : index
      %c0_110 = arith.constant 0 : index
      %202 = vector.load %arg5[%c0_109, %c0_110] : memref<128x128xf32, #tpu.memory_space<vmem>>, vector<128x128xf32>
      %cst_111 = arith.constant dense<0.000000e+00> : vector<32x128xf32>
      %203 = tpu.matmul %201, %202, %cst_111 {dimension_numbers = #tpu.dot_dimension_numbers<[1], [0], [0], [1], [0, 0, 1, 1], [], []>} : vector<32x128xf32>, vector<128x128xf32>, vector<32x128xf32> -> vector<32x128xf32>
      %204 = arith.addf %203, %16 : vector<32x128xf32>
      %205 = math.tanh %204 : vector<32x128xf32>
      %cst_112 = arith.constant 0.020833334 : f32
      %206 = vector.broadcast %cst_112 : f32 to vector<32x128xf32>
      %207 = arith.mulf %206, %205 : vector<32x128xf32>
      %208 = arith.addf %201, %207 : vector<32x128xf32>
      %cst_113 = arith.constant 6.250000e-02 : f32
      %209 = vector.broadcast %cst_113 : f32 to vector<32x128xf32>
      %210 = arith.mulf %209, %205 : vector<32x128xf32>
      %211 = arith.addf %201, %210 : vector<32x128xf32>
      %c0_114 = arith.constant 0 : index
      %c0_115 = arith.constant 0 : index
      %212 = vector.load %arg5[%c0_114, %c0_115] : memref<128x128xf32, #tpu.memory_space<vmem>>, vector<128x128xf32>
      %cst_116 = arith.constant dense<0.000000e+00> : vector<32x128xf32>
      %213 = tpu.matmul %211, %212, %cst_116 {dimension_numbers = #tpu.dot_dimension_numbers<[1], [0], [0], [1], [0, 0, 1, 1], [], []>} : vector<32x128xf32>, vector<128x128xf32>, vector<32x128xf32> -> vector<32x128xf32>
      %214 = arith.addf %213, %16 : vector<32x128xf32>
      %215 = math.tanh %214 : vector<32x128xf32>
      %cst_117 = arith.constant 0.0416666679 : f32
      %216 = vector.broadcast %cst_117 : f32 to vector<32x128xf32>
      %217 = arith.mulf %216, %215 : vector<32x128xf32>
      %218 = arith.addf %208, %217 : vector<32x128xf32>
      %cst_118 = arith.constant 6.250000e-02 : f32
      %219 = vector.broadcast %cst_118 : f32 to vector<32x128xf32>
      %220 = arith.mulf %219, %215 : vector<32x128xf32>
      %221 = arith.addf %201, %220 : vector<32x128xf32>
      %c0_119 = arith.constant 0 : index
      %c0_120 = arith.constant 0 : index
      %222 = vector.load %arg5[%c0_119, %c0_120] : memref<128x128xf32, #tpu.memory_space<vmem>>, vector<128x128xf32>
      %cst_121 = arith.constant dense<0.000000e+00> : vector<32x128xf32>
      %223 = tpu.matmul %221, %222, %cst_121 {dimension_numbers = #tpu.dot_dimension_numbers<[1], [0], [0], [1], [0, 0, 1, 1], [], []>} : vector<32x128xf32>, vector<128x128xf32>, vector<32x128xf32> -> vector<32x128xf32>
      %224 = arith.addf %223, %16 : vector<32x128xf32>
      %225 = math.tanh %224 : vector<32x128xf32>
      %cst_122 = arith.constant 0.0416666679 : f32
      %226 = vector.broadcast %cst_122 : f32 to vector<32x128xf32>
      %227 = arith.mulf %226, %225 : vector<32x128xf32>
      %228 = arith.addf %218, %227 : vector<32x128xf32>
      %cst_123 = arith.constant 1.250000e-01 : f32
      %229 = vector.broadcast %cst_123 : f32 to vector<32x128xf32>
      %230 = arith.mulf %229, %225 : vector<32x128xf32>
      %231 = arith.addf %201, %230 : vector<32x128xf32>
      %c0_124 = arith.constant 0 : index
      %c0_125 = arith.constant 0 : index
      %232 = vector.load %arg5[%c0_124, %c0_125] : memref<128x128xf32, #tpu.memory_space<vmem>>, vector<128x128xf32>
      %cst_126 = arith.constant dense<0.000000e+00> : vector<32x128xf32>
      %233 = tpu.matmul %231, %232, %cst_126 {dimension_numbers = #tpu.dot_dimension_numbers<[1], [0], [0], [1], [0, 0, 1, 1], [], []>} : vector<32x128xf32>, vector<128x128xf32>, vector<32x128xf32> -> vector<32x128xf32>
      %234 = arith.addf %233, %16 : vector<32x128xf32>
      %235 = math.tanh %234 : vector<32x128xf32>
      %cst_127 = arith.constant 0.020833334 : f32
      %236 = vector.broadcast %cst_127 : f32 to vector<32x128xf32>
      %237 = arith.mulf %236, %235 : vector<32x128xf32>
      %238 = arith.addf %228, %237 : vector<32x128xf32>
      %c6_i32 = arith.constant 6 : i32
      %c0_128 = arith.constant 0 : index
      %c0_129 = arith.constant 0 : index
      %239 = vector.load %arg5[%c0_128, %c0_129] : memref<128x128xf32, #tpu.memory_space<vmem>>, vector<128x128xf32>
      %cst_130 = arith.constant dense<0.000000e+00> : vector<32x128xf32>
      %240 = tpu.matmul %238, %239, %cst_130 {dimension_numbers = #tpu.dot_dimension_numbers<[1], [0], [0], [1], [0, 0, 1, 1], [], []>} : vector<32x128xf32>, vector<128x128xf32>, vector<32x128xf32> -> vector<32x128xf32>
      %241 = arith.addf %240, %16 : vector<32x128xf32>
      %242 = math.tanh %241 : vector<32x128xf32>
      %cst_131 = arith.constant 0.020833334 : f32
      %243 = vector.broadcast %cst_131 : f32 to vector<32x128xf32>
      %244 = arith.mulf %243, %242 : vector<32x128xf32>
      %245 = arith.addf %238, %244 : vector<32x128xf32>
      %cst_132 = arith.constant 6.250000e-02 : f32
      %246 = vector.broadcast %cst_132 : f32 to vector<32x128xf32>
      %247 = arith.mulf %246, %242 : vector<32x128xf32>
      %248 = arith.addf %238, %247 : vector<32x128xf32>
      %c0_133 = arith.constant 0 : index
      %c0_134 = arith.constant 0 : index
      %249 = vector.load %arg5[%c0_133, %c0_134] : memref<128x128xf32, #tpu.memory_space<vmem>>, vector<128x128xf32>
      %cst_135 = arith.constant dense<0.000000e+00> : vector<32x128xf32>
      %250 = tpu.matmul %248, %249, %cst_135 {dimension_numbers = #tpu.dot_dimension_numbers<[1], [0], [0], [1], [0, 0, 1, 1], [], []>} : vector<32x128xf32>, vector<128x128xf32>, vector<32x128xf32> -> vector<32x128xf32>
      %251 = arith.addf %250, %16 : vector<32x128xf32>
      %252 = math.tanh %251 : vector<32x128xf32>
      %cst_136 = arith.constant 0.0416666679 : f32
      %253 = vector.broadcast %cst_136 : f32 to vector<32x128xf32>
      %254 = arith.mulf %253, %252 : vector<32x128xf32>
      %255 = arith.addf %245, %254 : vector<32x128xf32>
      %cst_137 = arith.constant 6.250000e-02 : f32
      %256 = vector.broadcast %cst_137 : f32 to vector<32x128xf32>
      %257 = arith.mulf %256, %252 : vector<32x128xf32>
      %258 = arith.addf %238, %257 : vector<32x128xf32>
      %c0_138 = arith.constant 0 : index
      %c0_139 = arith.constant 0 : index
      %259 = vector.load %arg5[%c0_138, %c0_139] : memref<128x128xf32, #tpu.memory_space<vmem>>, vector<128x128xf32>
      %cst_140 = arith.constant dense<0.000000e+00> : vector<32x128xf32>
      %260 = tpu.matmul %258, %259, %cst_140 {dimension_numbers = #tpu.dot_dimension_numbers<[1], [0], [0], [1], [0, 0, 1, 1], [], []>} : vector<32x128xf32>, vector<128x128xf32>, vector<32x128xf32> -> vector<32x128xf32>
      %261 = arith.addf %260, %16 : vector<32x128xf32>
      %262 = math.tanh %261 : vector<32x128xf32>
      %cst_141 = arith.constant 0.0416666679 : f32
      %263 = vector.broadcast %cst_141 : f32 to vector<32x128xf32>
      %264 = arith.mulf %263, %262 : vector<32x128xf32>
      %265 = arith.addf %255, %264 : vector<32x128xf32>
      %cst_142 = arith.constant 1.250000e-01 : f32
      %266 = vector.broadcast %cst_142 : f32 to vector<32x128xf32>
      %267 = arith.mulf %266, %262 : vector<32x128xf32>
      %268 = arith.addf %238, %267 : vector<32x128xf32>
      %c0_143 = arith.constant 0 : index
      %c0_144 = arith.constant 0 : index
      %269 = vector.load %arg5[%c0_143, %c0_144] : memref<128x128xf32, #tpu.memory_space<vmem>>, vector<128x128xf32>
      %cst_145 = arith.constant dense<0.000000e+00> : vector<32x128xf32>
      %270 = tpu.matmul %268, %269, %cst_145 {dimension_numbers = #tpu.dot_dimension_numbers<[1], [0], [0], [1], [0, 0, 1, 1], [], []>} : vector<32x128xf32>, vector<128x128xf32>, vector<32x128xf32> -> vector<32x128xf32>
      %271 = arith.addf %270, %16 : vector<32x128xf32>
      %272 = math.tanh %271 : vector<32x128xf32>
      %cst_146 = arith.constant 0.020833334 : f32
      %273 = vector.broadcast %cst_146 : f32 to vector<32x128xf32>
      %274 = arith.mulf %273, %272 : vector<32x128xf32>
      %275 = arith.addf %265, %274 : vector<32x128xf32>
      %c7_i32 = arith.constant 7 : i32
      %c0_147 = arith.constant 0 : index
      %c0_148 = arith.constant 0 : index
      %276 = vector.load %arg5[%c0_147, %c0_148] : memref<128x128xf32, #tpu.memory_space<vmem>>, vector<128x128xf32>
      %cst_149 = arith.constant dense<0.000000e+00> : vector<32x128xf32>
      %277 = tpu.matmul %275, %276, %cst_149 {dimension_numbers = #tpu.dot_dimension_numbers<[1], [0], [0], [1], [0, 0, 1, 1], [], []>} : vector<32x128xf32>, vector<128x128xf32>, vector<32x128xf32> -> vector<32x128xf32>
      %278 = arith.addf %277, %16 : vector<32x128xf32>
      %279 = math.tanh %278 : vector<32x128xf32>
      %cst_150 = arith.constant 0.020833334 : f32
      %280 = vector.broadcast %cst_150 : f32 to vector<32x128xf32>
      %281 = arith.mulf %280, %279 : vector<32x128xf32>
      %282 = arith.addf %275, %281 : vector<32x128xf32>
      %cst_151 = arith.constant 6.250000e-02 : f32
      %283 = vector.broadcast %cst_151 : f32 to vector<32x128xf32>
      %284 = arith.mulf %283, %279 : vector<32x128xf32>
      %285 = arith.addf %275, %284 : vector<32x128xf32>
      %c0_152 = arith.constant 0 : index
      %c0_153 = arith.constant 0 : index
      %286 = vector.load %arg5[%c0_152, %c0_153] : memref<128x128xf32, #tpu.memory_space<vmem>>, vector<128x128xf32>
      %cst_154 = arith.constant dense<0.000000e+00> : vector<32x128xf32>
      %287 = tpu.matmul %285, %286, %cst_154 {dimension_numbers = #tpu.dot_dimension_numbers<[1], [0], [0], [1], [0, 0, 1, 1], [], []>} : vector<32x128xf32>, vector<128x128xf32>, vector<32x128xf32> -> vector<32x128xf32>
      %288 = arith.addf %287, %16 : vector<32x128xf32>
      %289 = math.tanh %288 : vector<32x128xf32>
      %cst_155 = arith.constant 0.0416666679 : f32
      %290 = vector.broadcast %cst_155 : f32 to vector<32x128xf32>
      %291 = arith.mulf %290, %289 : vector<32x128xf32>
      %292 = arith.addf %282, %291 : vector<32x128xf32>
      %cst_156 = arith.constant 6.250000e-02 : f32
      %293 = vector.broadcast %cst_156 : f32 to vector<32x128xf32>
      %294 = arith.mulf %293, %289 : vector<32x128xf32>
      %295 = arith.addf %275, %294 : vector<32x128xf32>
      %c0_157 = arith.constant 0 : index
      %c0_158 = arith.constant 0 : index
      %296 = vector.load %arg5[%c0_157, %c0_158] : memref<128x128xf32, #tpu.memory_space<vmem>>, vector<128x128xf32>
      %cst_159 = arith.constant dense<0.000000e+00> : vector<32x128xf32>
      %297 = tpu.matmul %295, %296, %cst_159 {dimension_numbers = #tpu.dot_dimension_numbers<[1], [0], [0], [1], [0, 0, 1, 1], [], []>} : vector<32x128xf32>, vector<128x128xf32>, vector<32x128xf32> -> vector<32x128xf32>
      %298 = arith.addf %297, %16 : vector<32x128xf32>
      %299 = math.tanh %298 : vector<32x128xf32>
      %cst_160 = arith.constant 0.0416666679 : f32
      %300 = vector.broadcast %cst_160 : f32 to vector<32x128xf32>
      %301 = arith.mulf %300, %299 : vector<32x128xf32>
      %302 = arith.addf %292, %301 : vector<32x128xf32>
      %cst_161 = arith.constant 1.250000e-01 : f32
      %303 = vector.broadcast %cst_161 : f32 to vector<32x128xf32>
      %304 = arith.mulf %303, %299 : vector<32x128xf32>
      %305 = arith.addf %275, %304 : vector<32x128xf32>
      %c0_162 = arith.constant 0 : index
      %c0_163 = arith.constant 0 : index
      %306 = vector.load %arg5[%c0_162, %c0_163] : memref<128x128xf32, #tpu.memory_space<vmem>>, vector<128x128xf32>
      %cst_164 = arith.constant dense<0.000000e+00> : vector<32x128xf32>
      %307 = tpu.matmul %305, %306, %cst_164 {dimension_numbers = #tpu.dot_dimension_numbers<[1], [0], [0], [1], [0, 0, 1, 1], [], []>} : vector<32x128xf32>, vector<128x128xf32>, vector<32x128xf32> -> vector<32x128xf32>
      %308 = arith.addf %307, %16 : vector<32x128xf32>
      %309 = math.tanh %308 : vector<32x128xf32>
      %cst_165 = arith.constant 0.020833334 : f32
      %310 = vector.broadcast %cst_165 : f32 to vector<32x128xf32>
      %311 = arith.mulf %310, %309 : vector<32x128xf32>
      %312 = arith.addf %302, %311 : vector<32x128xf32>
      %313 = arith.index_cast %arg8 : i32 to index
      %c0_166 = arith.constant 0 : index
      %c0_167 = arith.constant 0 : index
      %314 = vector.load %arg6[%313, %c0_166, %c0_167] : memref<8x32x128xf32, #tpu.memory_space<vmem>>, vector<1x32x128xf32>
      %315 = vector.shape_cast %314 : vector<1x32x128xf32> to vector<32x128xf32>
      %316 = vector.shape_cast %312 : vector<32x128xf32> to vector<1x32x128xf32>
      tpu.vector_store %arg6[%313, %c0_166, %c0_167], %316 {strides = array<i32>} : memref<8x32x128xf32, #tpu.memory_space<vmem>>, vector<1x32x128xf32>,
      scf.yield %312 : vector<32x128xf32>
    }
    %c8_i32_3 = arith.constant 8 : i32
    %c0_4 = arith.constant 0 : index
    %c0_5 = arith.constant 0 : index
    %6 = vector.load %arg7[%c0_4, %c0_5] : memref<32x128xf32, #tpu.memory_space<vmem>>, vector<32x128xf32>
    tpu.vector_store %arg7[%c0_4, %c0_5], %5 {strides = array<i32>} : memref<32x128xf32, #tpu.memory_space<vmem>>, vector<32x128xf32>,
    return
  }
  func.func @transform_0(%arg0: i32, %arg1: i32) -> (i32, i32, i32) {
    %c0_i32 = arith.constant 0 : i32
    %c0_i32_0 = arith.constant 0 : i32
    return %arg1, %arg0, %c0_i32 : i32, i32, i32
  }
  func.func @transform_1(%arg0: i32, %arg1: i32) -> (i32, i32, i32) {
    %c0_i32 = arith.constant 0 : i32
    %c0_i32_0 = arith.constant 0 : i32
    return %arg1, %arg0, %c0_i32 : i32, i32, i32
  }
  func.func @transform_2(%arg0: i32, %arg1: i32) -> (i32, i32) {
    %c0_i32 = arith.constant 0 : i32
    %c0_i32_0 = arith.constant 0 : i32
    %c0_i32_1 = arith.constant 0 : i32
    return %c0_i32, %c0_i32_0 : i32, i32
  }
  func.func @transform_3(%arg0: i32, %arg1: i32) -> (i32, i32) {
    %c0_i32 = arith.constant 0 : i32
    %c0_i32_0 = arith.constant 0 : i32
    %c0_i32_1 = arith.constant 0 : i32
    return %c0_i32, %c0_i32_0 : i32, i32
  }
  func.func @transform_4(%arg0: i32, %arg1: i32) -> (i32, i32, i32) {
    %c0_i32 = arith.constant 0 : i32
    %c0_i32_0 = arith.constant 0 : i32
    return %arg1, %arg0, %c0_i32 : i32, i32, i32
  }
}

</mosaic_0001>

<llo_original>
// kernel: ode_rnn_forward.1
$region0: #{ode_rnn_forward.1}
  #allocation0 [shape = 'u32[]', space=smem, size = 0x4, offset = 0x4, fixed_abs, tag = 'smem constant byte address 0x4 - core index']
  #allocation1 [shape = 'u32[72,128]{1,0:T(1,128)}', space=vmem, size = 0x9000, scoped, tag = 'internal scratch']
  #allocation2 [shape = 'f32[32,128]{1,0:T(8,128)}', space=vmem, size = 0x4000, scoped, tag = 'scratch operand']
  %s0 = inlined_call_operand.vmem [shape: f32[8,32,128], index: 0, kind: input, shape index: {}]
  %s1 = inlined_call_operand.vmem [shape: f32[8,32,128], index: 1, kind: input, shape index: {}]
  %s2 = inlined_call_operand.vmem [shape: f32[128,128], index: 2, kind: input, shape index: {}]
  %s3 = inlined_call_operand.vmem [shape: f32[128,128], index: 3, kind: input, shape index: {}]
  %s4 = inlined_call_operand.vmem [shape: f32[8,32,128], index: 4, kind: output, shape index: {}]
  %s5 = sld [smem:[#allocation0]]
  $region37: #{ode_rnn_forward.1} parent=0
    _
  %s7 = ssub.s32 1, %s5
  %s8 = scalar_select 0, %s7, %s5
  // Predicated region
  $region2: #{ode_rnn_forward.1} parent=0 // pred_check
    _
  $region3: #{ode_rnn_forward.1} parent=0 // pred_check_branch
    %10 = sbr.rel (0) target = $region5
  $region4: #{ode_rnn_forward.1} parent=0 // pred_region
    _
  $region5: #{ode_rnn_forward.1} parent=0 // pred_fallthru
    _
  // Predicated region
  $region6: #{ode_rnn_forward.1} parent=0 // pred_check
    _
  $region7: #{ode_rnn_forward.1} parent=0 // pred_check_branch
    %12 = sbr.rel (0) target = $region9
  $region8: #{ode_rnn_forward.1} parent=0 // pred_region
    _
  $region9: #{ode_rnn_forward.1} parent=0 // pred_fallthru
    _
  // Predicated region
  $region10: #{ode_rnn_forward.1} parent=0 // pred_check
    _
  $region11: #{ode_rnn_forward.1} parent=0 // pred_check_branch
    %14 = sbr.rel (0) target = $region13
  $region12: #{ode_rnn_forward.1} parent=0 // pred_region
    _
  $region13: #{ode_rnn_forward.1} parent=0 // pred_fallthru
    _
  // Predicated region
  $region14: #{ode_rnn_forward.1} parent=0 // pred_check
    _
  $region15: #{ode_rnn_forward.1} parent=0 // pred_check_branch
    %16 = sbr.rel (0) target = $region17
  $region16: #{ode_rnn_forward.1} parent=0 // pred_region
    _
  $region17: #{ode_rnn_forward.1} parent=0 // pred_fallthru
    _
  %p17 = scmp.eq.s32.totalorder 0, 0
  // Predicated region
  $region18: #{ode_rnn_forward.1} parent=0 // pred_check
    %p18 = pneg %p17
  $region19: #{ode_rnn_forward.1} parent=0 // pred_check_branch
    %20 = sbr.rel (%p18) target = $region21
  $region20: #{ode_rnn_forward.1} parent=0 // pred_region
    %21 = vst [vmem:[#allocation2] sm:$0xff] 0.0
    %22 = vst [vmem:[#allocation2 + $0x8] sm:$0xff] 0.0
    %23 = vst [vmem:[#allocation2 + $0x10] sm:$0xff] 0.0
    %24 = vst [vmem:[#allocation2 + $0x18] sm:$0xff] 0.0
  $region21: #{ode_rnn_forward.1} parent=0 // pred_fallthru
    _
  %v25 = vld [vmem:[#allocation2] sm:$0xff]
  %v26 = vld [vmem:[#allocation2 + $0x8] sm:$0xff]
  %v27 = vld [vmem:[#allocation2 + $0x10] sm:$0xff]
  %v28 = vld [vmem:[#allocation2 + $0x18] sm:$0xff]
  loop: start=0, step=1, limit=8
  $region22: #{ode_rnn_forward.1} parent=0 // loop_pre_header
    _
  $region23: #{ode_rnn_forward.1} parent=0 // loop_header
    %s30 = sphi 0, %s34
    %p31 = scmp.ge.s32.totalorder %s30, 8
    %v35 = vphi %v25, %v1619
    %v36 = vphi %v26, %v1620
    %v37 = vphi %v27, %v1621
    %v38 = vphi %v28, %v1622
  $region24: #{ode_rnn_forward.1} parent=0 // loop_header_branch
    %33 = sbr.rel (%p31) target = $region28
  $region25: #{ode_rnn_forward.1} parent=0 // loop_body
    %s39 = smul.u32 %s30, 32
    %s40 = scalar_lea.vmem %s0, %s39
    %v41 = vld [vmem:[%s40] sm:$0xff]
    %v42 = vld [vmem:[%s40 + $0x8] sm:$0xff]
    %v43 = vld [vmem:[%s40 + $0x10] sm:$0xff]
    %v44 = vld [vmem:[%s40 + $0x18] sm:$0xff]
    %v45 = vld [vmem:[%s2] sm:$0xff]
    %v46 = vld [vmem:[%s2 + $0x8] sm:$0xff]
    %v47 = vld [vmem:[%s2 + $0x10] sm:$0xff]
    %v48 = vld [vmem:[%s2 + $0x18] sm:$0xff]
    %v49 = vld [vmem:[%s2 + $0x20] sm:$0xff]
    %v50 = vld [vmem:[%s2 + $0x28] sm:$0xff]
    %v51 = vld [vmem:[%s2 + $0x30] sm:$0xff]
    %v52 = vld [vmem:[%s2 + $0x38] sm:$0xff]
    %v53 = vld [vmem:[%s2 + $0x40] sm:$0xff]
    %v54 = vld [vmem:[%s2 + $0x48] sm:$0xff]
    %v55 = vld [vmem:[%s2 + $0x50] sm:$0xff]
    %v56 = vld [vmem:[%s2 + $0x58] sm:$0xff]
    %v57 = vld [vmem:[%s2 + $0x60] sm:$0xff]
    %v58 = vld [vmem:[%s2 + $0x68] sm:$0xff]
    %v59 = vld [vmem:[%s2 + $0x70] sm:$0xff]
    %v60 = vld [vmem:[%s2 + $0x78] sm:$0xff]
    %61 = vmatpush.msra.mxu0 %v60
    %62 = vmatpush.msra.mxu0 %v59
    %63 = vmatpush.msra.mxu0 %v58
    %64 = vmatpush.msra.mxu0 %v57
    %65 = vmatpush.msra.mxu0 %v56
    %66 = vmatpush.msra.mxu0 %v55
    %67 = vmatpush.msra.mxu0 %v54
    %68 = vmatpush.msra.mxu0 %v53
    %69 = vmatpush.msra.mxu0 %v52
    %70 = vmatpush.msra.mxu0 %v51
    %71 = vmatpush.msra.mxu0 %v50
    %72 = vmatpush.msra.mxu0 %v49
    %73 = vmatpush.msra.mxu0 %v48
    %74 = vmatpush.msra.mxu0 %v47
    %75 = vmatpush.msra.mxu0 %v46
    %76 = vmatpush.msra.mxu0 %v45
    %77 = vmatmul.f32.gmra.mxu0 %v35
    %v78 = vpop.f32.mrf.mxu0
    %v79 = vadd.f32 0.0, %v78
    %80 = vmatmul.f32.gmra.mxu0 %v36
    %v81 = vpop.f32.mrf.mxu0
    %v82 = vadd.f32 0.0, %v81
    %83 = vmatmul.f32.gmra.mxu0 %v37
    %v84 = vpop.f32.mrf.mxu0
    %v85 = vadd.f32 0.0, %v84
    %86 = vmatmul.f32.gmra.mxu0 %v38
    %v87 = vpop.f32.mrf.mxu0
    %v88 = vadd.f32 0.0, %v87
    %89 = vdwg.mxu0
    %v90 = vadd.f32 %v41, %v79
    %v91 = vadd.f32 %v42, %v82
    %v92 = vadd.f32 %v43, %v85
    %v93 = vadd.f32 %v44, %v88
    %v94 = vtanh.pop %v90
    %v95 = vtanh.pop %v91
    %v96 = vtanh.pop %v92
    %v97 = vtanh.pop %v93
    %s98 = scalar_lea.vmem %s1, %s39
    %v99 = vld [vmem:[%s98] sm:$0xff]
    %v100 = vld [vmem:[%s98 + $0x8] sm:$0xff]
    %v101 = vld [vmem:[%s98 + $0x10] sm:$0xff]
    %v102 = vld [vmem:[%s98 + $0x18] sm:$0xff]
    %v103 = vld [vmem:[%s3] sm:$0xff]
    %v104 = vld [vmem:[%s3 + $0x8] sm:$0xff]
    %v105 = vld [vmem:[%s3 + $0x10] sm:$0xff]
    %v106 = vld [vmem:[%s3 + $0x18] sm:$0xff]
    %v107 = vld [vmem:[%s3 + $0x20] sm:$0xff]
    %v108 = vld [vmem:[%s3 + $0x28] sm:$0xff]
    %v109 = vld [vmem:[%s3 + $0x30] sm:$0xff]
    %v110 = vld [vmem:[%s3 + $0x38] sm:$0xff]
    %v111 = vld [vmem:[%s3 + $0x40] sm:$0xff]
    %v112 = vld [vmem:[%s3 + $0x48] sm:$0xff]
    %v113 = vld [vmem:[%s3 + $0x50] sm:$0xff]
    %v114 = vld [vmem:[%s3 + $0x58] sm:$0xff]
    %v115 = vld [vmem:[%s3 + $0x60] sm:$0xff]
    %v116 = vld [vmem:[%s3 + $0x68] sm:$0xff]
    %v117 = vld [vmem:[%s3 + $0x70] sm:$0xff]
    %v118 = vld [vmem:[%s3 + $0x78] sm:$0xff]
    %119 = vmatpush.msra.mxu0 %v118
    %120 = vmatpush.msra.mxu0 %v117
    %121 = vmatpush.msra.mxu0 %v116
    %122 = vmatpush.msra.mxu0 %v115
    %123 = vmatpush.msra.mxu0 %v114
    %124 = vmatpush.msra.mxu0 %v113
    %125 = vmatpush.msra.mxu0 %v112
    %126 = vmatpush.msra.mxu0 %v111
    %127 = vmatpush.msra.mxu0 %v110
    %128 = vmatpush.msra.mxu0 %v109
    %129 = vmatpush.msra.mxu0 %v108
    %130 = vmatpush.msra.mxu0 %v107
    %131 = vmatpush.msra.mxu0 %v106
    %132 = vmatpush.msra.mxu0 %v105
    %133 = vmatpush.msra.mxu0 %v104
    %134 = vmatpush.msra.mxu0 %v103
    %135 = vmatmul.f32.gmra.mxu0 %v94
    %v136 = vpop.f32.mrf.mxu0
    %v137 = vadd.f32 %v99, %v136
    %138 = vmatmul.f32.gmra.mxu0 %v95
    %v139 = vpop.f32.mrf.mxu0
    %v140 = vadd.f32 %v100, %v139
    %141 = vmatmul.f32.gmra.mxu0 %v96
    %v142 = vpop.f32.mrf.mxu0
    %v143 = vadd.f32 %v101, %v142
    %144 = vmatmul.f32.gmra.mxu0 %v97
    %v145 = vpop.f32.mrf.mxu0
    %v146 = vadd.f32 %v102, %v145
    %147 = vdwg.mxu0
    %v148 = vtanh.pop %v137
    %v149 = vtanh.pop %v140
    %v150 = vtanh.pop %v143
    %v151 = vtanh.pop %v146
    %v152 = vmul.f32 %v148, 0.020833334
    %v153 = vmul.f32 %v149, 0.020833334
    %v154 = vmul.f32 %v150, 0.020833334
    %v155 = vmul.f32 %v151, 0.020833334
    %v156 = vadd.f32 %v94, %v152
    %v157 = vadd.f32 %v95, %v153
    %v158 = vadd.f32 %v96, %v154
    %v159 = vadd.f32 %v97, %v155
    %v160 = vmul.f32 %v148, 0.0625
    %v161 = vmul.f32 %v149, 0.0625
    %v162 = vmul.f32 %v150, 0.0625
    %v163 = vmul.f32 %v151, 0.0625
    %v164 = vadd.f32 %v94, %v160
    %v165 = vadd.f32 %v95, %v161
    %v166 = vadd.f32 %v96, %v162
    %v167 = vadd.f32 %v97, %v163
    %168 = vmatpush.msra.mxu0 %v118
    %169 = vmatpush.msra.mxu0 %v117
    %170 = vmatpush.msra.mxu0 %v116
    %171 = vmatpush.msra.mxu0 %v115
    %172 = vmatpush.msra.mxu0 %v114
    %173 = vmatpush.msra.mxu0 %v113
    %174 = vmatpush.msra.mxu0 %v112
    %175 = vmatpush.msra.mxu0 %v111
    %176 = vmatpush.msra.mxu0 %v110
    %177 = vmatpush.msra.mxu0 %v109
    %178 = vmatpush.msra.mxu0 %v108
    %179 = vmatpush.msra.mxu0 %v107
    %180 = vmatpush.msra.mxu0 %v106
    %181 = vmatpush.msra.mxu0 %v105
    %182 = vmatpush.msra.mxu0 %v104
    %183 = vmatpush.msra.mxu0 %v103
    %184 = vmatmul.f32.gmra.mxu0 %v164
    %v185 = vpop.f32.mrf.mxu0
    %v186 = vadd.f32 %v99, %v185
    %187 = vmatmul.f32.gmra.mxu0 %v165
    %v188 = vpop.f32.mrf.mxu0
    %v189 = vadd.f32 %v100, %v188
    %190 = vmatmul.f32.gmra.mxu0 %v166
    %v191 = vpop.f32.mrf.mxu0
    %v192 = vadd.f32 %v101, %v191
    %193 = vmatmul.f32.gmra.mxu0 %v167
    %v194 = vpop.f32.mrf.mxu0
    %v195 = vadd.f32 %v102, %v194
    %196 = vdwg.mxu0
    %v197 = vtanh.pop %v186
    %v198 = vtanh.pop %v189
    %v199 = vtanh.pop %v192
    %v200 = vtanh.pop %v195
    %v201 = vmul.f32 %v197, 0.041666668
    %v202 = vmul.f32 %v198, 0.041666668
    %v203 = vmul.f32 %v199, 0.041666668
    %v204 = vmul.f32 %v200, 0.041666668
    %v205 = vadd.f32 %v156, %v201
    %v206 = vadd.f32 %v157, %v202
    %v207 = vadd.f32 %v158, %v203
    %v208 = vadd.f32 %v159, %v204
    %v209 = vmul.f32 %v197, 0.0625
    %v210 = vmul.f32 %v198, 0.0625
    %v211 = vmul.f32 %v199, 0.0625
    %v212 = vmul.f32 %v200, 0.0625
    %v213 = vadd.f32 %v94, %v209
    %v214 = vadd.f32 %v95, %v210
    %v215 = vadd.f32 %v96, %v211
    %v216 = vadd.f32 %v97, %v212
    %217 = vmatpush.msra.mxu0 %v118
    %218 = vmatpush.msra.mxu0 %v117
    %219 = vmatpush.msra.mxu0 %v116
    %220 = vmatpush.msra.mxu0 %v115
    %221 = vmatpush.msra.mxu0 %v114
    %222 = vmatpush.msra.mxu0 %v113
    %223 = vmatpush.msra.mxu0 %v112
    %224 = vmatpush.msra.mxu0 %v111
    %225 = vmatpush.msra.mxu0 %v110
    %226 = vmatpush.msra.mxu0 %v109
    %227 = vmatpush.msra.mxu0 %v108
    %228 = vmatpush.msra.mxu0 %v107
    %229 = vmatpush.msra.mxu0 %v106
    %230 = vmatpush.msra.mxu0 %v105
    %231 = vmatpush.msra.mxu0 %v104
    %232 = vmatpush.msra.mxu0 %v103
    %233 = vmatmul.f32.gmra.mxu0 %v213
    %v234 = vpop.f32.mrf.mxu0
    %v235 = vadd.f32 %v99, %v234
    %236 = vmatmul.f32.gmra.mxu0 %v214
    %v237 = vpop.f32.mrf.mxu0
    %v238 = vadd.f32 %v100, %v237
    %239 = vmatmul.f32.gmra.mxu0 %v215
    %v240 = vpop.f32.mrf.mxu0
    %v241 = vadd.f32 %v101, %v240
    %242 = vmatmul.f32.gmra.mxu0 %v216
    %v243 = vpop.f32.mrf.mxu0
    %v244 = vadd.f32 %v102, %v243
    %245 = vdwg.mxu0
    %v246 = vtanh.pop %v235
    %v247 = vtanh.pop %v238
    %v248 = vtanh.pop %v241
    %v249 = vtanh.pop %v244
    %v250 = vmul.f32 %v246, 0.041666668
    %v251 = vmul.f32 %v247, 0.041666668
    %v252 = vmul.f32 %v248, 0.041666668
    %v253 = vmul.f32 %v249, 0.041666668
    %v254 = vadd.f32 %v205, %v250
    %v255 = vadd.f32 %v206, %v251
    %v256 = vadd.f32 %v207, %v252
    %v257 = vadd.f32 %v208, %v253
    %v258 = vmul.f32 %v246, 0.125
    %v259 = vmul.f32 %v247, 0.125
    %v260 = vmul.f32 %v248, 0.125
    %v261 = vmul.f32 %v249, 0.125
    %v262 = vadd.f32 %v94, %v258
    %v263 = vadd.f32 %v95, %v259
    %v264 = vadd.f32 %v96, %v260
    %v265 = vadd.f32 %v97, %v261
    %266 = vmatpush.msra.mxu0 %v118
    %267 = vmatpush.msra.mxu0 %v117
    %268 = vmatpush.msra.mxu0 %v116
    %269 = vmatpush.msra.mxu0 %v115
    %270 = vmatpush.msra.mxu0 %v114
    %271 = vmatpush.msra.mxu0 %v113
    %272 = vmatpush.msra.mxu0 %v112
    %273 = vmatpush.msra.mxu0 %v111
    %274 = vmatpush.msra.mxu0 %v110
    %275 = vmatpush.msra.mxu0 %v109
    %276 = vmatpush.msra.mxu0 %v108
    %277 = vmatpush.msra.mxu0 %v107
    %278 = vmatpush.msra.mxu0 %v106
    %279 = vmatpush.msra.mxu0 %v105
    %280 = vmatpush.msra.mxu0 %v104
    %281 = vmatpush.msra.mxu0 %v103
    %282 = vmatmul.f32.gmra.mxu0 %v262
    %v283 = vpop.f32.mrf.mxu0
    %v284 = vadd.f32 %v99, %v283
    %285 = vmatmul.f32.gmra.mxu0 %v263
    %v286 = vpop.f32.mrf.mxu0
    %v287 = vadd.f32 %v100, %v286
    %288 = vmatmul.f32.gmra.mxu0 %v264
    %v289 = vpop.f32.mrf.mxu0
    %v290 = vadd.f32 %v101, %v289
    %291 = vmatmul.f32.gmra.mxu0 %v265
    %v292 = vpop.f32.mrf.mxu0
    %v293 = vadd.f32 %v102, %v292
    %294 = vdwg.mxu0
    %v295 = vtanh.pop %v284
    %v296 = vtanh.pop %v287
    %v297 = vtanh.pop %v290
    %v298 = vtanh.pop %v293
    %v299 = vmul.f32 %v295, 0.020833334
    %v300 = vmul.f32 %v296, 0.020833334
    %v301 = vmul.f32 %v297, 0.020833334
    %v302 = vmul.f32 %v298, 0.020833334
    %v303 = vadd.f32 %v254, %v299
    %v304 = vadd.f32 %v255, %v300
    %v305 = vadd.f32 %v256, %v301
    %v306 = vadd.f32 %v257, %v302
    %307 = vmatpush.msra.mxu0 %v118
    %308 = vmatpush.msra.mxu0 %v117
    %309 = vmatpush.msra.mxu0 %v116
    %310 = vmatpush.msra.mxu0 %v115
    %311 = vmatpush.msra.mxu0 %v114
    %312 = vmatpush.msra.mxu0 %v113
    %313 = vmatpush.msra.mxu0 %v112
    %314 = vmatpush.msra.mxu0 %v111
    %315 = vmatpush.msra.mxu0 %v110
    %316 = vmatpush.msra.mxu0 %v109
    %317 = vmatpush.msra.mxu0 %v108
    %318 = vmatpush.msra.mxu0 %v107
    %319 = vmatpush.msra.mxu0 %v106
    %320 = vmatpush.msra.mxu0 %v105
    %321 = vmatpush.msra.mxu0 %v104
    %322 = vmatpush.msra.mxu0 %v103
    %323 = vmatmul.f32.gmra.mxu0 %v303
    %v324 = vpop.f32.mrf.mxu0
    %v325 = vadd.f32 %v99, %v324
    %326 = vmatmul.f32.gmra.mxu0 %v304
    %v327 = vpop.f32.mrf.mxu0
    %v328 = vadd.f32 %v100, %v327
    %329 = vmatmul.f32.gmra.mxu0 %v305
    %v330 = vpop.f32.mrf.mxu0
    %v331 = vadd.f32 %v101, %v330
    %332 = vmatmul.f32.gmra.mxu0 %v306
    %v333 = vpop.f32.mrf.mxu0
    %v334 = vadd.f32 %v102, %v333
    %335 = vdwg.mxu0
    %v336 = vtanh.pop %v325
    %v337 = vtanh.pop %v328
    %v338 = vtanh.pop %v331
    %v339 = vtanh.pop %v334
    %v340 = vmul.f32 %v336, 0.020833334
    %v341 = vmul.f32 %v337, 0.020833334
    %v342 = vmul.f32 %v338, 0.020833334
    %v343 = vmul.f32 %v339, 0.020833334
    %v344 = vadd.f32 %v303, %v340
    %v345 = vadd.f32 %v304, %v341
    %v346 = vadd.f32 %v305, %v342
    %v347 = vadd.f32 %v306, %v343
    %v348 = vmul.f32 %v336, 0.0625
    %v349 = vmul.f32 %v337, 0.0625
    %v350 = vmul.f32 %v338, 0.0625
    %v351 = vmul.f32 %v339, 0.0625
    %v352 = vadd.f32 %v303, %v348
    %v353 = vadd.f32 %v304, %v349
    %v354 = vadd.f32 %v305, %v350
    %v355 = vadd.f32 %v306, %v351
    %356 = vmatpush.msra.mxu0 %v118
    %357 = vmatpush.msra.mxu0 %v117
    %358 = vmatpush.msra.mxu0 %v116
    %359 = vmatpush.msra.mxu0 %v115
    %360 = vmatpush.msra.mxu0 %v114
    %361 = vmatpush.msra.mxu0 %v113
    %362 = vmatpush.msra.mxu0 %v112
    %363 = vmatpush.msra.mxu0 %v111
    %364 = vmatpush.msra.mxu0 %v110
    %365 = vmatpush.msra.mxu0 %v109
    %366 = vmatpush.msra.mxu0 %v108
    %367 = vmatpush.msra.mxu0 %v107
    %368 = vmatpush.msra.mxu0 %v106
    %369 = vmatpush.msra.mxu0 %v105
    %370 = vmatpush.msra.mxu0 %v104
    %371 = vmatpush.msra.mxu0 %v103
    %372 = vmatmul.f32.gmra.mxu0 %v352
    %v373 = vpop.f32.mrf.mxu0
    %v374 = vadd.f32 %v99, %v373
    %375 = vmatmul.f32.gmra.mxu0 %v353
    %v376 = vpop.f32.mrf.mxu0
    %v377 = vadd.f32 %v100, %v376
    %378 = vmatmul.f32.gmra.mxu0 %v354
    %v379 = vpop.f32.mrf.mxu0
    %v380 = vadd.f32 %v101, %v379
    %381 = vmatmul.f32.gmra.mxu0 %v355
    %v382 = vpop.f32.mrf.mxu0
    %v383 = vadd.f32 %v102, %v382
    %384 = vdwg.mxu0
    %v385 = vtanh.pop %v374
    %v386 = vtanh.pop %v377
    %v387 = vtanh.pop %v380
    %v388 = vtanh.pop %v383
    %v389 = vmul.f32 %v385, 0.041666668
    %v390 = vmul.f32 %v386, 0.041666668
    %v391 = vmul.f32 %v387, 0.041666668
    %v392 = vmul.f32 %v388, 0.041666668
    %v393 = vadd.f32 %v344, %v389
    %v394 = vadd.f32 %v345, %v390
    %v395 = vadd.f32 %v346, %v391
    %v396 = vadd.f32 %v347, %v392
    %v397 = vmul.f32 %v385, 0.0625
    %v398 = vmul.f32 %v386, 0.0625
    %v399 = vmul.f32 %v387, 0.0625
    %v400 = vmul.f32 %v388, 0.0625
    %v401 = vadd.f32 %v303, %v397
    %v402 = vadd.f32 %v304, %v398
    %v403 = vadd.f32 %v305, %v399
    %v404 = vadd.f32 %v306, %v400
    %405 = vmatpush.msra.mxu0 %v118
    %406 = vmatpush.msra.mxu0 %v117
    %407 = vmatpush.msra.mxu0 %v116
    %408 = vmatpush.msra.mxu0 %v115
    %409 = vmatpush.msra.mxu0 %v114
    %410 = vmatpush.msra.mxu0 %v113
    %411 = vmatpush.msra.mxu0 %v112
    %412 = vmatpush.msra.mxu0 %v111
    %413 = vmatpush.msra.mxu0 %v110
    %414 = vmatpush.msra.mxu0 %v109
    %415 = vmatpush.msra.mxu0 %v108
    %416 = vmatpush.msra.mxu0 %v107
    %417 = vmatpush.msra.mxu0 %v106
    %418 = vmatpush.msra.mxu0 %v105
    %419 = vmatpush.msra.mxu0 %v104
    %420 = vmatpush.msra.mxu0 %v103
    %421 = vmatmul.f32.gmra.mxu0 %v401
    %v422 = vpop.f32.mrf.mxu0
    %v423 = vadd.f32 %v99, %v422
    %424 = vmatmul.f32.gmra.mxu0 %v402
    %v425 = vpop.f32.mrf.mxu0
    %v426 = vadd.f32 %v100, %v425
    %427 = vmatmul.f32.gmra.mxu0 %v403
    %v428 = vpop.f32.mrf.mxu0
    %v429 = vadd.f32 %v101, %v428
    %430 = vmatmul.f32.gmra.mxu0 %v404
    %v431 = vpop.f32.mrf.mxu0
    %v432 = vadd.f32 %v102, %v431
    %433 = vdwg.mxu0
    %v434 = vtanh.pop %v423
    %v435 = vtanh.pop %v426
    %v436 = vtanh.pop %v429
    %v437 = vtanh.pop %v432
    %v438 = vmul.f32 %v434, 0.041666668
    %v439 = vmul.f32 %v435, 0.041666668
    %v440 = vmul.f32 %v436, 0.041666668
    %v441 = vmul.f32 %v437, 0.041666668
    %v442 = vadd.f32 %v393, %v438
    %v443 = vadd.f32 %v394, %v439
    %v444 = vadd.f32 %v395, %v440
    %v445 = vadd.f32 %v396, %v441
    %v446 = vmul.f32 %v434, 0.125
    %v447 = vmul.f32 %v435, 0.125
    %v448 = vmul.f32 %v436, 0.125
    %v449 = vmul.f32 %v437, 0.125
    %v450 = vadd.f32 %v303, %v446
    %v451 = vadd.f32 %v304, %v447
    %v452 = vadd.f32 %v305, %v448
    %v453 = vadd.f32 %v306, %v449
    %454 = vmatpush.msra.mxu0 %v118
    %455 = vmatpush.msra.mxu0 %v117
    %456 = vmatpush.msra.mxu0 %v116
    %457 = vmatpush.msra.mxu0 %v115
    %458 = vmatpush.msra.mxu0 %v114
    %459 = vmatpush.msra.mxu0 %v113
    %460 = vmatpush.msra.mxu0 %v112
    %461 = vmatpush.msra.mxu0 %v111
    %462 = vmatpush.msra.mxu0 %v110
    %463 = vmatpush.msra.mxu0 %v109
    %464 = vmatpush.msra.mxu0 %v108
    %465 = vmatpush.msra.mxu0 %v107
    %466 = vmatpush.msra.mxu0 %v106
    %467 = vmatpush.msra.mxu0 %v105
    %468 = vmatpush.msra.mxu0 %v104
    %469 = vmatpush.msra.mxu0 %v103
    %470 = vmatmul.f32.gmra.mxu0 %v450
    %v471 = vpop.f32.mrf.mxu0
    %v472 = vadd.f32 %v99, %v471
    %473 = vmatmul.f32.gmra.mxu0 %v451
    %v474 = vpop.f32.mrf.mxu0
    %v475 = vadd.f32 %v100, %v474
    %476 = vmatmul.f32.gmra.mxu0 %v452
    %v477 = vpop.f32.mrf.mxu0
    %v478 = vadd.f32 %v101, %v477
    %479 = vmatmul.f32.gmra.mxu0 %v453
    %v480 = vpop.f32.mrf.mxu0
    %v481 = vadd.f32 %v102, %v480
    %482 = vdwg.mxu0
    %v483 = vtanh.pop %v472
    %v484 = vtanh.pop %v475
    %v485 = vtanh.pop %v478
    %v486 = vtanh.pop %v481
    %v487 = vmul.f32 %v483, 0.020833334
    %v488 = vmul.f32 %v484, 0.020833334
    %v489 = vmul.f32 %v485, 0.020833334
    %v490 = vmul.f32 %v486, 0.020833334
    %v491 = vadd.f32 %v442, %v487
    %v492 = vadd.f32 %v443, %v488
    %v493 = vadd.f32 %v444, %v489
    %v494 = vadd.f32 %v445, %v490
    %495 = vmatpush.msra.mxu0 %v118
    %496 = vmatpush.msra.mxu0 %v117
    %497 = vmatpush.msra.mxu0 %v116
    %498 = vmatpush.msra.mxu0 %v115
    %499 = vmatpush.msra.mxu0 %v114
    %500 = vmatpush.msra.mxu0 %v113
    %501 = vmatpush.msra.mxu0 %v112
    %502 = vmatpush.msra.mxu0 %v111
    %503 = vmatpush.msra.mxu0 %v110
    %504 = vmatpush.msra.mxu0 %v109
    %505 = vmatpush.msra.mxu0 %v108
    %506 = vmatpush.msra.mxu0 %v107
    %507 = vmatpush.msra.mxu0 %v106
    %508 = vmatpush.msra.mxu0 %v105
    %509 = vmatpush.msra.mxu0 %v104
    %510 = vmatpush.msra.mxu0 %v103
    %511 = vmatmul.f32.gmra.mxu0 %v491
    %v512 = vpop.f32.mrf.mxu0
    %v513 = vadd.f32 %v99, %v512
    %514 = vmatmul.f32.gmra.mxu0 %v492
    %v515 = vpop.f32.mrf.mxu0
    %v516 = vadd.f32 %v100, %v515
    %517 = vmatmul.f32.gmra.mxu0 %v493
    %v518 = vpop.f32.mrf.mxu0
    %v519 = vadd.f32 %v101, %v518
    %520 = vmatmul.f32.gmra.mxu0 %v494
    %v521 = vpop.f32.mrf.mxu0
    %v522 = vadd.f32 %v102, %v521
    %523 = vdwg.mxu0
    %v524 = vtanh.pop %v513
    %v525 = vtanh.pop %v516
    %v526 = vtanh.pop %v519
    %v527 = vtanh.pop %v522
    %v528 = vmul.f32 %v524, 0.020833334
    %v529 = vmul.f32 %v525, 0.020833334
    %v530 = vmul.f32 %v526, 0.020833334
    %v531 = vmul.f32 %v527, 0.020833334
    %v532 = vadd.f32 %v491, %v528
    %v533 = vadd.f32 %v492, %v529
    %v534 = vadd.f32 %v493, %v530
    %v535 = vadd.f32 %v494, %v531
    %v536 = vmul.f32 %v524, 0.0625
    %v537 = vmul.f32 %v525, 0.0625
    %v538 = vmul.f32 %v526, 0.0625
    %v539 = vmul.f32 %v527, 0.0625
    %v540 = vadd.f32 %v491, %v536
    %v541 = vadd.f32 %v492, %v537
    %v542 = vadd.f32 %v493, %v538
    %v543 = vadd.f32 %v494, %v539
    %544 = vmatpush.msra.mxu0 %v118
    %545 = vmatpush.msra.mxu0 %v117
    %546 = vmatpush.msra.mxu0 %v116
    %547 = vmatpush.msra.mxu0 %v115
    %548 = vmatpush.msra.mxu0 %v114
    %549 = vmatpush.msra.mxu0 %v113
    %550 = vmatpush.msra.mxu0 %v112
    %551 = vmatpush.msra.mxu0 %v111
    %552 = vmatpush.msra.mxu0 %v110
    %553 = vmatpush.msra.mxu0 %v109
    %554 = vmatpush.msra.mxu0 %v108
    %555 = vmatpush.msra.mxu0 %v107
    %556 = vmatpush.msra.mxu0 %v106
    %557 = vmatpush.msra.mxu0 %v105
    %558 = vmatpush.msra.mxu0 %v104
    %559 = vmatpush.msra.mxu0 %v103
    %560 = vmatmul.f32.gmra.mxu0 %v540
    %v561 = vpop.f32.mrf.mxu0
    %v562 = vadd.f32 %v99, %v561
    %563 = vmatmul.f32.gmra.mxu0 %v541
    %v564 = vpop.f32.mrf.mxu0
    %v565 = vadd.f32 %v100, %v564
    %566 = vmatmul.f32.gmra.mxu0 %v542
    %v567 = vpop.f32.mrf.mxu0
    %v568 = vadd.f32 %v101, %v567
    %569 = vmatmul.f32.gmra.mxu0 %v543
    %v570 = vpop.f32.mrf.mxu0
    %v571 = vadd.f32 %v102, %v570
    %572 = vdwg.mxu0
    %v573 = vtanh.pop %v562
    %v574 = vtanh.pop %v565
    %v575 = vtanh.pop %v568
    %v576 = vtanh.pop %v571
    %v577 = vmul.f32 %v573, 0.041666668
    %v578 = vmul.f32 %v574, 0.041666668
    %v579 = vmul.f32 %v575, 0.041666668
    %v580 = vmul.f32 %v576, 0.041666668
    %v581 = vadd.f32 %v532, %v577
    %v582 = vadd.f32 %v533, %v578
    %v583 = vadd.f32 %v534, %v579
    %v584 = vadd.f32 %v535, %v580
    %v585 = vmul.f32 %v573, 0.0625
    %v586 = vmul.f32 %v574, 0.0625
    %v587 = vmul.f32 %v575, 0.0625
    %v588 = vmul.f32 %v576, 0.0625
    %v589 = vadd.f32 %v491, %v585
    %v590 = vadd.f32 %v492, %v586
    %v591 = vadd.f32 %v493, %v587
    %v592 = vadd.f32 %v494, %v588
    %593 = vmatpush.msra.mxu0 %v118
    %594 = vmatpush.msra.mxu0 %v117
    %595 = vmatpush.msra.mxu0 %v116
    %596 = vmatpush.msra.mxu0 %v115
    %597 = vmatpush.msra.mxu0 %v114
    %598 = vmatpush.msra.mxu0 %v113
    %599 = vmatpush.msra.mxu0 %v112
    %600 = vmatpush.msra.mxu0 %v111
    %601 = vmatpush.msra.mxu0 %v110
    %602 = vmatpush.msra.mxu0 %v109
    %603 = vmatpush.msra.mxu0 %v108
    %604 = vmatpush.msra.mxu0 %v107
    %605 = vmatpush.msra.mxu0 %v106
    %606 = vmatpush.msra.mxu0 %v105
    %607 = vmatpush.msra.mxu0 %v104
    %608 = vmatpush.msra.mxu0 %v103
    %609 = vmatmul.f32.gmra.mxu0 %v589
    %v610 = vpop.f32.mrf.mxu0
    %v611 = vadd.f32 %v99, %v610
    %612 = vmatmul.f32.gmra.mxu0 %v590
    %v613 = vpop.f32.mrf.mxu0
    %v614 = vadd.f32 %v100, %v613
    %615 = vmatmul.f32.gmra.mxu0 %v591
    %v616 = vpop.f32.mrf.mxu0
    %v617 = vadd.f32 %v101, %v616
    %618 = vmatmul.f32.gmra.mxu0 %v592
    %v619 = vpop.f32.mrf.mxu0
    %v620 = vadd.f32 %v102, %v619
    %621 = vdwg.mxu0
    %v622 = vtanh.pop %v611
    %v623 = vtanh.pop %v614
    %v624 = vtanh.pop %v617
    %v625 = vtanh.pop %v620
    %v626 = vmul.f32 %v622, 0.041666668
    %v627 = vmul.f32 %v623, 0.041666668
    %v628 = vmul.f32 %v624, 0.041666668
    %v629 = vmul.f32 %v625, 0.041666668
    %v630 = vadd.f32 %v581, %v626
    %v631 = vadd.f32 %v582, %v627
    %v632 = vadd.f32 %v583, %v628
    %v633 = vadd.f32 %v584, %v629
    %v634 = vmul.f32 %v622, 0.125
    %v635 = vmul.f32 %v623, 0.125
    %v636 = vmul.f32 %v624, 0.125
    %v637 = vmul.f32 %v625, 0.125
    %v638 = vadd.f32 %v491, %v634
    %v639 = vadd.f32 %v492, %v635
    %v640 = vadd.f32 %v493, %v636
    %v641 = vadd.f32 %v494, %v637
    %642 = vmatpush.msra.mxu0 %v118
    %643 = vmatpush.msra.mxu0 %v117
    %644 = vmatpush.msra.mxu0 %v116
    %645 = vmatpush.msra.mxu0 %v115
    %646 = vmatpush.msra.mxu0 %v114
    %647 = vmatpush.msra.mxu0 %v113
    %648 = vmatpush.msra.mxu0 %v112
    %649 = vmatpush.msra.mxu0 %v111
    %650 = vmatpush.msra.mxu0 %v110
    %651 = vmatpush.msra.mxu0 %v109
    %652 = vmatpush.msra.mxu0 %v108
    %653 = vmatpush.msra.mxu0 %v107
    %654 = vmatpush.msra.mxu0 %v106
    %655 = vmatpush.msra.mxu0 %v105
    %656 = vmatpush.msra.mxu0 %v104
    %657 = vmatpush.msra.mxu0 %v103
    %658 = vmatmul.f32.gmra.mxu0 %v638
    %v659 = vpop.f32.mrf.mxu0
    %v660 = vadd.f32 %v99, %v659
    %661 = vmatmul.f32.gmra.mxu0 %v639
    %v662 = vpop.f32.mrf.mxu0
    %v663 = vadd.f32 %v100, %v662
    %664 = vmatmul.f32.gmra.mxu0 %v640
    %v665 = vpop.f32.mrf.mxu0
    %v666 = vadd.f32 %v101, %v665
    %667 = vmatmul.f32.gmra.mxu0 %v641
    %v668 = vpop.f32.mrf.mxu0
    %v669 = vadd.f32 %v102, %v668
    %670 = vdwg.mxu0
    %v671 = vtanh.pop %v660
    %v672 = vtanh.pop %v663
    %v673 = vtanh.pop %v666
    %v674 = vtanh.pop %v669
    %v675 = vmul.f32 %v671, 0.020833334
    %v676 = vmul.f32 %v672, 0.020833334
    %v677 = vmul.f32 %v673, 0.020833334
    %v678 = vmul.f32 %v674, 0.020833334
    %v679 = vadd.f32 %v630, %v675
    %v680 = vadd.f32 %v631, %v676
    %v681 = vadd.f32 %v632, %v677
    %v682 = vadd.f32 %v633, %v678
    %683 = vmatpush.msra.mxu0 %v118
    %684 = vmatpush.msra.mxu0 %v117
    %685 = vmatpush.msra.mxu0 %v116
    %686 = vmatpush.msra.mxu0 %v115
    %687 = vmatpush.msra.mxu0 %v114
    %688 = vmatpush.msra.mxu0 %v113
    %689 = vmatpush.msra.mxu0 %v112
    %690 = vmatpush.msra.mxu0 %v111
    %691 = vmatpush.msra.mxu0 %v110
    %692 = vmatpush.msra.mxu0 %v109
    %693 = vmatpush.msra.mxu0 %v108
    %694 = vmatpush.msra.mxu0 %v107
    %695 = vmatpush.msra.mxu0 %v106
    %696 = vmatpush.msra.mxu0 %v105
    %697 = vmatpush.msra.mxu0 %v104
    %698 = vmatpush.msra.mxu0 %v103
    %699 = vmatmul.f32.gmra.mxu0 %v679
    %v700 = vpop.f32.mrf.mxu0
    %v701 = vadd.f32 %v99, %v700
    %702 = vmatmul.f32.gmra.mxu0 %v680
    %v703 = vpop.f32.mrf.mxu0
    %v704 = vadd.f32 %v100, %v703
    %705 = vmatmul.f32.gmra.mxu0 %v681
    %v706 = vpop.f32.mrf.mxu0
    %v707 = vadd.f32 %v101, %v706
    %708 = vmatmul.f32.gmra.mxu0 %v682
    %v709 = vpop.f32.mrf.mxu0
    %v710 = vadd.f32 %v102, %v709
    %711 = vdwg.mxu0
    %v712 = vtanh.pop %v701
    %v713 = vtanh.pop %v704
    %v714 = vtanh.pop %v707
    %v715 = vtanh.pop %v710
    %v716 = vmul.f32 %v712, 0.020833334
    %v717 = vmul.f32 %v713, 0.020833334
    %v718 = vmul.f32 %v714, 0.020833334
    %v719 = vmul.f32 %v715, 0.020833334
    %v720 = vadd.f32 %v679, %v716
    %v721 = vadd.f32 %v680, %v717
    %v722 = vadd.f32 %v681, %v718
    %v723 = vadd.f32 %v682, %v719
    %v724 = vmul.f32 %v712, 0.0625
    %v725 = vmul.f32 %v713, 0.0625
    %v726 = vmul.f32 %v714, 0.0625
    %v727 = vmul.f32 %v715, 0.0625
    %v728 = vadd.f32 %v679, %v724
    %v729 = vadd.f32 %v680, %v725
    %v730 = vadd.f32 %v681, %v726
    %v731 = vadd.f32 %v682, %v727
    %732 = vmatpush.msra.mxu0 %v118
    %733 = vmatpush.msra.mxu0 %v117
    %734 = vmatpush.msra.mxu0 %v116
    %735 = vmatpush.msra.mxu0 %v115
    %736 = vmatpush.msra.mxu0 %v114
    %737 = vmatpush.msra.mxu0 %v113
    %738 = vmatpush.msra.mxu0 %v112
    %739 = vmatpush.msra.mxu0 %v111
    %740 = vmatpush.msra.mxu0 %v110
    %741 = vmatpush.msra.mxu0 %v109
    %742 = vmatpush.msra.mxu0 %v108
    %743 = vmatpush.msra.mxu0 %v107
    %744 = vmatpush.msra.mxu0 %v106
    %745 = vmatpush.msra.mxu0 %v105
    %746 = vmatpush.msra.mxu0 %v104
    %747 = vmatpush.msra.mxu0 %v103
    %748 = vmatmul.f32.gmra.mxu0 %v728
    %v749 = vpop.f32.mrf.mxu0
    %v750 = vadd.f32 %v99, %v749
    %751 = vmatmul.f32.gmra.mxu0 %v729
    %v752 = vpop.f32.mrf.mxu0
    %v753 = vadd.f32 %v100, %v752
    %754 = vmatmul.f32.gmra.mxu0 %v730
    %v755 = vpop.f32.mrf.mxu0
    %v756 = vadd.f32 %v101, %v755
    %757 = vmatmul.f32.gmra.mxu0 %v731
    %v758 = vpop.f32.mrf.mxu0
    %v759 = vadd.f32 %v102, %v758
    %760 = vdwg.mxu0
    %v761 = vtanh.pop %v750
    %v762 = vtanh.pop %v753
    %v763 = vtanh.pop %v756
    %v764 = vtanh.pop %v759
    %v765 = vmul.f32 %v761, 0.041666668
    %v766 = vmul.f32 %v762, 0.041666668
    %v767 = vmul.f32 %v763, 0.041666668
    %v768 = vmul.f32 %v764, 0.041666668
    %v769 = vadd.f32 %v720, %v765
    %v770 = vadd.f32 %v721, %v766
    %v771 = vadd.f32 %v722, %v767
    %v772 = vadd.f32 %v723, %v768
    %v773 = vmul.f32 %v761, 0.0625
    %v774 = vmul.f32 %v762, 0.0625
    %v775 = vmul.f32 %v763, 0.0625
    %v776 = vmul.f32 %v764, 0.0625
    %v777 = vadd.f32 %v679, %v773
    %v778 = vadd.f32 %v680, %v774
    %v779 = vadd.f32 %v681, %v775
    %v780 = vadd.f32 %v682, %v776
    %781 = vmatpush.msra.mxu0 %v118
    %782 = vmatpush.msra.mxu0 %v117
    %783 = vmatpush.msra.mxu0 %v116
    %784 = vmatpush.msra.mxu0 %v115
    %785 = vmatpush.msra.mxu0 %v114
    %786 = vmatpush.msra.mxu0 %v113
    %787 = vmatpush.msra.mxu0 %v112
    %788 = vmatpush.msra.mxu0 %v111
    %789 = vmatpush.msra.mxu0 %v110
    %790 = vmatpush.msra.mxu0 %v109
    %791 = vmatpush.msra.mxu0 %v108
    %792 = vmatpush.msra.mxu0 %v107
    %793 = vmatpush.msra.mxu0 %v106
    %794 = vmatpush.msra.mxu0 %v105
    %795 = vmatpush.msra.mxu0 %v104
    %796 = vmatpush.msra.mxu0 %v103
    %797 = vmatmul.f32.gmra.mxu0 %v777
    %v798 = vpop.f32.mrf.mxu0
    %v799 = vadd.f32 %v99, %v798
    %800 = vmatmul.f32.gmra.mxu0 %v778
    %v801 = vpop.f32.mrf.mxu0
    %v802 = vadd.f32 %v100, %v801
    %803 = vmatmul.f32.gmra.mxu0 %v779
    %v804 = vpop.f32.mrf.mxu0
    %v805 = vadd.f32 %v101, %v804
    %806 = vmatmul.f32.gmra.mxu0 %v780
    %v807 = vpop.f32.mrf.mxu0
    %v808 = vadd.f32 %v102, %v807
    %809 = vdwg.mxu0
    %v810 = vtanh.pop %v799
    %v811 = vtanh.pop %v802
    %v812 = vtanh.pop %v805
    %v813 = vtanh.pop %v808
    %v814 = vmul.f32 %v810, 0.041666668
    %v815 = vmul.f32 %v811, 0.041666668
    %v816 = vmul.f32 %v812, 0.041666668
    %v817 = vmul.f32 %v813, 0.041666668
    %v818 = vadd.f32 %v769, %v814
    %v819 = vadd.f32 %v770, %v815
    %v820 = vadd.f32 %v771, %v816
    %v821 = vadd.f32 %v772, %v817
    %v822 = vmul.f32 %v810, 0.125
    %v823 = vmul.f32 %v811, 0.125
    %v824 = vmul.f32 %v812, 0.125
    %v825 = vmul.f32 %v813, 0.125
    %v826 = vadd.f32 %v679, %v822
    %v827 = vadd.f32 %v680, %v823
    %v828 = vadd.f32 %v681, %v824
    %v829 = vadd.f32 %v682, %v825
    %830 = vmatpush.msra.mxu0 %v118
    %831 = vmatpush.msra.mxu0 %v117
    %832 = vmatpush.msra.mxu0 %v116
    %833 = vmatpush.msra.mxu0 %v115
    %834 = vmatpush.msra.mxu0 %v114
    %835 = vmatpush.msra.mxu0 %v113
    %836 = vmatpush.msra.mxu0 %v112
    %837 = vmatpush.msra.mxu0 %v111
    %838 = vmatpush.msra.mxu0 %v110
    %839 = vmatpush.msra.mxu0 %v109
    %840 = vmatpush.msra.mxu0 %v108
    %841 = vmatpush.msra.mxu0 %v107
    %842 = vmatpush.msra.mxu0 %v106
    %843 = vmatpush.msra.mxu0 %v105
    %844 = vmatpush.msra.mxu0 %v104
    %845 = vmatpush.msra.mxu0 %v103
    %846 = vmatmul.f32.gmra.mxu0 %v826
    %v847 = vpop.f32.mrf.mxu0
    %v848 = vadd.f32 %v99, %v847
    %849 = vmatmul.f32.gmra.mxu0 %v827
    %v850 = vpop.f32.mrf.mxu0
    %v851 = vadd.f32 %v100, %v850
    %852 = vmatmul.f32.gmra.mxu0 %v828
    %v853 = vpop.f32.mrf.mxu0
    %v854 = vadd.f32 %v101, %v853
    %855 = vmatmul.f32.gmra.mxu0 %v829
    %v856 = vpop.f32.mrf.mxu0
    %v857 = vadd.f32 %v102, %v856
    %858 = vdwg.mxu0
    %v859 = vtanh.pop %v848
    %v860 = vtanh.pop %v851
    %v861 = vtanh.pop %v854
    %v862 = vtanh.pop %v857
    %v863 = vmul.f32 %v859, 0.020833334
    %v864 = vmul.f32 %v860, 0.020833334
    %v865 = vmul.f32 %v861, 0.020833334
    %v866 = vmul.f32 %v862, 0.020833334
    %v867 = vadd.f32 %v818, %v863
    %v868 = vadd.f32 %v819, %v864
    %v869 = vadd.f32 %v820, %v865
    %v870 = vadd.f32 %v821, %v866
    %871 = vmatpush.msra.mxu0 %v118
    %872 = vmatpush.msra.mxu0 %v117
    %873 = vmatpush.msra.mxu0 %v116
    %874 = vmatpush.msra.mxu0 %v115
    %875 = vmatpush.msra.mxu0 %v114
    %876 = vmatpush.msra.mxu0 %v113
    %877 = vmatpush.msra.mxu0 %v112
    %878 = vmatpush.msra.mxu0 %v111
    %879 = vmatpush.msra.mxu0 %v110
    %880 = vmatpush.msra.mxu0 %v109
    %881 = vmatpush.msra.mxu0 %v108
    %882 = vmatpush.msra.mxu0 %v107
    %883 = vmatpush.msra.mxu0 %v106
    %884 = vmatpush.msra.mxu0 %v105
    %885 = vmatpush.msra.mxu0 %v104
    %886 = vmatpush.msra.mxu0 %v103
    %887 = vmatmul.f32.gmra.mxu0 %v867
    %v888 = vpop.f32.mrf.mxu0
    %v889 = vadd.f32 %v99, %v888
    %890 = vmatmul.f32.gmra.mxu0 %v868
    %v891 = vpop.f32.mrf.mxu0
    %v892 = vadd.f32 %v100, %v891
    %893 = vmatmul.f32.gmra.mxu0 %v869
    %v894 = vpop.f32.mrf.mxu0
    %v895 = vadd.f32 %v101, %v894
    %896 = vmatmul.f32.gmra.mxu0 %v870
    %v897 = vpop.f32.mrf.mxu0
    %v898 = vadd.f32 %v102, %v897
    %899 = vdwg.mxu0
    %v900 = vtanh.pop %v889
    %v901 = vtanh.pop %v892
    %v902 = vtanh.pop %v895
    %v903 = vtanh.pop %v898
    %v904 = vmul.f32 %v900, 0.020833334
    %v905 = vmul.f32 %v901, 0.020833334
    %v906 = vmul.f32 %v902, 0.020833334
    %v907 = vmul.f32 %v903, 0.020833334
    %v908 = vadd.f32 %v867, %v904
    %v909 = vadd.f32 %v868, %v905
    %v910 = vadd.f32 %v869, %v906
    %v911 = vadd.f32 %v870, %v907
    %v912 = vmul.f32 %v900, 0.0625
    %v913 = vmul.f32 %v901, 0.0625
    %v914 = vmul.f32 %v902, 0.0625
    %v915 = vmul.f32 %v903, 0.0625
    %v916 = vadd.f32 %v867, %v912
    %v917 = vadd.f32 %v868, %v913
    %v918 = vadd.f32 %v869, %v914
    %v919 = vadd.f32 %v870, %v915
    %920 = vmatpush.msra.mxu0 %v118
    %921 = vmatpush.msra.mxu0 %v117
    %922 = vmatpush.msra.mxu0 %v116
    %923 = vmatpush.msra.mxu0 %v115
    %924 = vmatpush.msra.mxu0 %v114
    %925 = vmatpush.msra.mxu0 %v113
    %926 = vmatpush.msra.mxu0 %v112
    %927 = vmatpush.msra.mxu0 %v111
    %928 = vmatpush.msra.mxu0 %v110
    %929 = vmatpush.msra.mxu0 %v109
    %930 = vmatpush.msra.mxu0 %v108
    %931 = vmatpush.msra.mxu0 %v107
    %932 = vmatpush.msra.mxu0 %v106
    %933 = vmatpush.msra.mxu0 %v105
    %934 = vmatpush.msra.mxu0 %v104
    %935 = vmatpush.msra.mxu0 %v103
    %936 = vmatmul.f32.gmra.mxu0 %v916
    %v937 = vpop.f32.mrf.mxu0
    %v938 = vadd.f32 %v99, %v937
    %939 = vmatmul.f32.gmra.mxu0 %v917
    %v940 = vpop.f32.mrf.mxu0
    %v941 = vadd.f32 %v100, %v940
    %942 = vmatmul.f32.gmra.mxu0 %v918
    %v943 = vpop.f32.mrf.mxu0
    %v944 = vadd.f32 %v101, %v943
    %945 = vmatmul.f32.gmra.mxu0 %v919
    %v946 = vpop.f32.mrf.mxu0
    %v947 = vadd.f32 %v102, %v946
    %948 = vdwg.mxu0
    %v949 = vtanh.pop %v938
    %v950 = vtanh.pop %v941
    %v951 = vtanh.pop %v944
    %v952 = vtanh.pop %v947
    %v953 = vmul.f32 %v949, 0.041666668
    %v954 = vmul.f32 %v950, 0.041666668
    %v955 = vmul.f32 %v951, 0.041666668
    %v956 = vmul.f32 %v952, 0.041666668
    %v957 = vadd.f32 %v908, %v953
    %v958 = vadd.f32 %v909, %v954
    %v959 = vadd.f32 %v910, %v955
    %v960 = vadd.f32 %v911, %v956
    %v961 = vmul.f32 %v949, 0.0625
    %v962 = vmul.f32 %v950, 0.0625
    %v963 = vmul.f32 %v951, 0.0625
    %v964 = vmul.f32 %v952, 0.0625
    %v965 = vadd.f32 %v867, %v961
    %v966 = vadd.f32 %v868, %v962
    %v967 = vadd.f32 %v869, %v963
    %v968 = vadd.f32 %v870, %v964
    %969 = vmatpush.msra.mxu0 %v118
    %970 = vmatpush.msra.mxu0 %v117
    %971 = vmatpush.msra.mxu0 %v116
    %972 = vmatpush.msra.mxu0 %v115
    %973 = vmatpush.msra.mxu0 %v114
    %974 = vmatpush.msra.mxu0 %v113
    %975 = vmatpush.msra.mxu0 %v112
    %976 = vmatpush.msra.mxu0 %v111
    %977 = vmatpush.msra.mxu0 %v110
    %978 = vmatpush.msra.mxu0 %v109
    %979 = vmatpush.msra.mxu0 %v108
    %980 = vmatpush.msra.mxu0 %v107
    %981 = vmatpush.msra.mxu0 %v106
    %982 = vmatpush.msra.mxu0 %v105
    %983 = vmatpush.msra.mxu0 %v104
    %984 = vmatpush.msra.mxu0 %v103
    %985 = vmatmul.f32.gmra.mxu0 %v965
    %v986 = vpop.f32.mrf.mxu0
    %v987 = vadd.f32 %v99, %v986
    %988 = vmatmul.f32.gmra.mxu0 %v966
    %v989 = vpop.f32.mrf.mxu0
    %v990 = vadd.f32 %v100, %v989
    %991 = vmatmul.f32.gmra.mxu0 %v967
    %v992 = vpop.f32.mrf.mxu0
    %v993 = vadd.f32 %v101, %v992
    %994 = vmatmul.f32.gmra.mxu0 %v968
    %v995 = vpop.f32.mrf.mxu0
    %v996 = vadd.f32 %v102, %v995
    %997 = vdwg.mxu0
    %v998 = vtanh.pop %v987
    %v999 = vtanh.pop %v990
    %v1000 = vtanh.pop %v993
    %v1001 = vtanh.pop %v996
    %v1002 = vmul.f32 %v998, 0.041666668
    %v1003 = vmul.f32 %v999, 0.041666668
    %v1004 = vmul.f32 %v1000, 0.041666668
    %v1005 = vmul.f32 %v1001, 0.041666668
    %v1006 = vadd.f32 %v957, %v1002
    %v1007 = vadd.f32 %v958, %v1003
    %v1008 = vadd.f32 %v959, %v1004
    %v1009 = vadd.f32 %v960, %v1005
    %v1010 = vmul.f32 %v998, 0.125
    %v1011 = vmul.f32 %v999, 0.125
    %v1012 = vmul.f32 %v1000, 0.125
    %v1013 = vmul.f32 %v1001, 0.125
    %v1014 = vadd.f32 %v867, %v1010
    %v1015 = vadd.f32 %v868, %v1011
    %v1016 = vadd.f32 %v869, %v1012
    %v1017 = vadd.f32 %v870, %v1013
    %1018 = vmatpush.msra.mxu0 %v118
    %1019 = vmatpush.msra.mxu0 %v117
    %1020 = vmatpush.msra.mxu0 %v116
    %1021 = vmatpush.msra.mxu0 %v115
    %1022 = vmatpush.msra.mxu0 %v114
    %1023 = vmatpush.msra.mxu0 %v113
    %1024 = vmatpush.msra.mxu0 %v112
    %1025 = vmatpush.msra.mxu0 %v111
    %1026 = vmatpush.msra.mxu0 %v110
    %1027 = vmatpush.msra.mxu0 %v109
    %1028 = vmatpush.msra.mxu0 %v108
    %1029 = vmatpush.msra.mxu0 %v107
    %1030 = vmatpush.msra.mxu0 %v106
    %1031 = vmatpush.msra.mxu0 %v105
    %1032 = vmatpush.msra.mxu0 %v104
    %1033 = vmatpush.msra.mxu0 %v103
    %1034 = vmatmul.f32.gmra.mxu0 %v1014
    %v1035 = vpop.f32.mrf.mxu0
    %v1036 = vadd.f32 %v99, %v1035
    %1037 = vmatmul.f32.gmra.mxu0 %v1015
    %v1038 = vpop.f32.mrf.mxu0
    %v1039 = vadd.f32 %v100, %v1038
    %1040 = vmatmul.f32.gmra.mxu0 %v1016
    %v1041 = vpop.f32.mrf.mxu0
    %v1042 = vadd.f32 %v101, %v1041
    %1043 = vmatmul.f32.gmra.mxu0 %v1017
    %v1044 = vpop.f32.mrf.mxu0
    %v1045 = vadd.f32 %v102, %v1044
    %1046 = vdwg.mxu0
    %v1047 = vtanh.pop %v1036
    %v1048 = vtanh.pop %v1039
    %v1049 = vtanh.pop %v1042
    %v1050 = vtanh.pop %v1045
    %v1051 = vmul.f32 %v1047, 0.020833334
    %v1052 = vmul.f32 %v1048, 0.020833334
    %v1053 = vmul.f32 %v1049, 0.020833334
    %v1054 = vmul.f32 %v1050, 0.020833334
    %v1055 = vadd.f32 %v1006, %v1051
    %v1056 = vadd.f32 %v1007, %v1052
    %v1057 = vadd.f32 %v1008, %v1053
    %v1058 = vadd.f32 %v1009, %v1054
    %1059 = vmatpush.msra.mxu0 %v118
    %1060 = vmatpush.msra.mxu0 %v117
    %1061 = vmatpush.msra.mxu0 %v116
    %1062 = vmatpush.msra.mxu0 %v115
    %1063 = vmatpush.msra.mxu0 %v114
    %1064 = vmatpush.msra.mxu0 %v113
    %1065 = vmatpush.msra.mxu0 %v112
    %1066 = vmatpush.msra.mxu0 %v111
    %1067 = vmatpush.msra.mxu0 %v110
    %1068 = vmatpush.msra.mxu0 %v109
    %1069 = vmatpush.msra.mxu0 %v108
    %1070 = vmatpush.msra.mxu0 %v107
    %1071 = vmatpush.msra.mxu0 %v106
    %1072 = vmatpush.msra.mxu0 %v105
    %1073 = vmatpush.msra.mxu0 %v104
    %1074 = vmatpush.msra.mxu0 %v103
    %1075 = vmatmul.f32.gmra.mxu0 %v1055
    %v1076 = vpop.f32.mrf.mxu0
    %v1077 = vadd.f32 %v99, %v1076
    %1078 = vmatmul.f32.gmra.mxu0 %v1056
    %v1079 = vpop.f32.mrf.mxu0
    %v1080 = vadd.f32 %v100, %v1079
    %1081 = vmatmul.f32.gmra.mxu0 %v1057
    %v1082 = vpop.f32.mrf.mxu0
    %v1083 = vadd.f32 %v101, %v1082
    %1084 = vmatmul.f32.gmra.mxu0 %v1058
    %v1085 = vpop.f32.mrf.mxu0
    %v1086 = vadd.f32 %v102, %v1085
    %1087 = vdwg.mxu0
    %v1088 = vtanh.pop %v1077
    %v1089 = vtanh.pop %v1080
    %v1090 = vtanh.pop %v1083
    %v1091 = vtanh.pop %v1086
    %v1092 = vmul.f32 %v1088, 0.020833334
    %v1093 = vmul.f32 %v1089, 0.020833334
    %v1094 = vmul.f32 %v1090, 0.020833334
    %v1095 = vmul.f32 %v1091, 0.020833334
    %v1096 = vadd.f32 %v1055, %v1092
    %v1097 = vadd.f32 %v1056, %v1093
    %v1098 = vadd.f32 %v1057, %v1094
    %v1099 = vadd.f32 %v1058, %v1095
    %v1100 = vmul.f32 %v1088, 0.0625
    %v1101 = vmul.f32 %v1089, 0.0625
    %v1102 = vmul.f32 %v1090, 0.0625
    %v1103 = vmul.f32 %v1091, 0.0625
    %v1104 = vadd.f32 %v1055, %v1100
    %v1105 = vadd.f32 %v1056, %v1101
    %v1106 = vadd.f32 %v1057, %v1102
    %v1107 = vadd.f32 %v1058, %v1103
    %1108 = vmatpush.msra.mxu0 %v118
    %1109 = vmatpush.msra.mxu0 %v117
    %1110 = vmatpush.msra.mxu0 %v116
    %1111 = vmatpush.msra.mxu0 %v115
    %1112 = vmatpush.msra.mxu0 %v114
    %1113 = vmatpush.msra.mxu0 %v113
    %1114 = vmatpush.msra.mxu0 %v112
    %1115 = vmatpush.msra.mxu0 %v111
    %1116 = vmatpush.msra.mxu0 %v110
    %1117 = vmatpush.msra.mxu0 %v109
    %1118 = vmatpush.msra.mxu0 %v108
    %1119 = vmatpush.msra.mxu0 %v107
    %1120 = vmatpush.msra.mxu0 %v106
    %1121 = vmatpush.msra.mxu0 %v105
    %1122 = vmatpush.msra.mxu0 %v104
    %1123 = vmatpush.msra.mxu0 %v103
    %1124 = vmatmul.f32.gmra.mxu0 %v1104
    %v1125 = vpop.f32.mrf.mxu0
    %v1126 = vadd.f32 %v99, %v1125
    %1127 = vmatmul.f32.gmra.mxu0 %v1105
    %v1128 = vpop.f32.mrf.mxu0
    %v1129 = vadd.f32 %v100, %v1128
    %1130 = vmatmul.f32.gmra.mxu0 %v1106
    %v1131 = vpop.f32.mrf.mxu0
    %v1132 = vadd.f32 %v101, %v1131
    %1133 = vmatmul.f32.gmra.mxu0 %v1107
    %v1134 = vpop.f32.mrf.mxu0
    %v1135 = vadd.f32 %v102, %v1134
    %1136 = vdwg.mxu0
    %v1137 = vtanh.pop %v1126
    %v1138 = vtanh.pop %v1129
    %v1139 = vtanh.pop %v1132
    %v1140 = vtanh.pop %v1135
    %v1141 = vmul.f32 %v1137, 0.041666668
    %v1142 = vmul.f32 %v1138, 0.041666668
    %v1143 = vmul.f32 %v1139, 0.041666668
    %v1144 = vmul.f32 %v1140, 0.041666668
    %v1145 = vadd.f32 %v1096, %v1141
    %v1146 = vadd.f32 %v1097, %v1142
    %v1147 = vadd.f32 %v1098, %v1143
    %v1148 = vadd.f32 %v1099, %v1144
    %v1149 = vmul.f32 %v1137, 0.0625
    %v1150 = vmul.f32 %v1138, 0.0625
    %v1151 = vmul.f32 %v1139, 0.0625
    %v1152 = vmul.f32 %v1140, 0.0625
    %v1153 = vadd.f32 %v1055, %v1149
    %v1154 = vadd.f32 %v1056, %v1150
    %v1155 = vadd.f32 %v1057, %v1151
    %v1156 = vadd.f32 %v1058, %v1152
    %1157 = vmatpush.msra.mxu0 %v118
    %1158 = vmatpush.msra.mxu0 %v117
    %1159 = vmatpush.msra.mxu0 %v116
    %1160 = vmatpush.msra.mxu0 %v115
    %1161 = vmatpush.msra.mxu0 %v114
    %1162 = vmatpush.msra.mxu0 %v113
    %1163 = vmatpush.msra.mxu0 %v112
    %1164 = vmatpush.msra.mxu0 %v111
    %1165 = vmatpush.msra.mxu0 %v110
    %1166 = vmatpush.msra.mxu0 %v109
    %1167 = vmatpush.msra.mxu0 %v108
    %1168 = vmatpush.msra.mxu0 %v107
    %1169 = vmatpush.msra.mxu0 %v106
    %1170 = vmatpush.msra.mxu0 %v105
    %1171 = vmatpush.msra.mxu0 %v104
    %1172 = vmatpush.msra.mxu0 %v103
    %1173 = vmatmul.f32.gmra.mxu0 %v1153
    %v1174 = vpop.f32.mrf.mxu0
    %v1175 = vadd.f32 %v99, %v1174
    %1176 = vmatmul.f32.gmra.mxu0 %v1154
    %v1177 = vpop.f32.mrf.mxu0
    %v1178 = vadd.f32 %v100, %v1177
    %1179 = vmatmul.f32.gmra.mxu0 %v1155
    %v1180 = vpop.f32.mrf.mxu0
    %v1181 = vadd.f32 %v101, %v1180
    %1182 = vmatmul.f32.gmra.mxu0 %v1156
    %v1183 = vpop.f32.mrf.mxu0
    %v1184 = vadd.f32 %v102, %v1183
    %1185 = vdwg.mxu0
    %v1186 = vtanh.pop %v1175
    %v1187 = vtanh.pop %v1178
    %v1188 = vtanh.pop %v1181
    %v1189 = vtanh.pop %v1184
    %v1190 = vmul.f32 %v1186, 0.041666668
    %v1191 = vmul.f32 %v1187, 0.041666668
    %v1192 = vmul.f32 %v1188, 0.041666668
    %v1193 = vmul.f32 %v1189, 0.041666668
    %v1194 = vadd.f32 %v1145, %v1190
    %v1195 = vadd.f32 %v1146, %v1191
    %v1196 = vadd.f32 %v1147, %v1192
    %v1197 = vadd.f32 %v1148, %v1193
    %v1198 = vmul.f32 %v1186, 0.125
    %v1199 = vmul.f32 %v1187, 0.125
    %v1200 = vmul.f32 %v1188, 0.125
    %v1201 = vmul.f32 %v1189, 0.125
    %v1202 = vadd.f32 %v1055, %v1198
    %v1203 = vadd.f32 %v1056, %v1199
    %v1204 = vadd.f32 %v1057, %v1200
    %v1205 = vadd.f32 %v1058, %v1201
    %1206 = vmatpush.msra.mxu0 %v118
    %1207 = vmatpush.msra.mxu0 %v117
    %1208 = vmatpush.msra.mxu0 %v116
    %1209 = vmatpush.msra.mxu0 %v115
    %1210 = vmatpush.msra.mxu0 %v114
    %1211 = vmatpush.msra.mxu0 %v113
    %1212 = vmatpush.msra.mxu0 %v112
    %1213 = vmatpush.msra.mxu0 %v111
    %1214 = vmatpush.msra.mxu0 %v110
    %1215 = vmatpush.msra.mxu0 %v109
    %1216 = vmatpush.msra.mxu0 %v108
    %1217 = vmatpush.msra.mxu0 %v107
    %1218 = vmatpush.msra.mxu0 %v106
    %1219 = vmatpush.msra.mxu0 %v105
    %1220 = vmatpush.msra.mxu0 %v104
    %1221 = vmatpush.msra.mxu0 %v103
    %1222 = vmatmul.f32.gmra.mxu0 %v1202
    %v1223 = vpop.f32.mrf.mxu0
    %v1224 = vadd.f32 %v99, %v1223
    %1225 = vmatmul.f32.gmra.mxu0 %v1203
    %v1226 = vpop.f32.mrf.mxu0
    %v1227 = vadd.f32 %v100, %v1226
    %1228 = vmatmul.f32.gmra.mxu0 %v1204
    %v1229 = vpop.f32.mrf.mxu0
    %v1230 = vadd.f32 %v101, %v1229
    %1231 = vmatmul.f32.gmra.mxu0 %v1205
    %v1232 = vpop.f32.mrf.mxu0
    %v1233 = vadd.f32 %v102, %v1232
    %1234 = vdwg.mxu0
    %v1235 = vtanh.pop %v1224
    %v1236 = vtanh.pop %v1227
    %v1237 = vtanh.pop %v1230
    %v1238 = vtanh.pop %v1233
    %v1239 = vmul.f32 %v1235, 0.020833334
    %v1240 = vmul.f32 %v1236, 0.020833334
    %v1241 = vmul.f32 %v1237, 0.020833334
    %v1242 = vmul.f32 %v1238, 0.020833334
    %v1243 = vadd.f32 %v1194, %v1239
    %v1244 = vadd.f32 %v1195, %v1240
    %v1245 = vadd.f32 %v1196, %v1241
    %v1246 = vadd.f32 %v1197, %v1242
    %1247 = vmatpush.msra.mxu0 %v118
    %1248 = vmatpush.msra.mxu0 %v117
    %1249 = vmatpush.msra.mxu0 %v116
    %1250 = vmatpush.msra.mxu0 %v115
    %1251 = vmatpush.msra.mxu0 %v114
    %1252 = vmatpush.msra.mxu0 %v113
    %1253 = vmatpush.msra.mxu0 %v112
    %1254 = vmatpush.msra.mxu0 %v111
    %1255 = vmatpush.msra.mxu0 %v110
    %1256 = vmatpush.msra.mxu0 %v109
    %1257 = vmatpush.msra.mxu0 %v108
    %1258 = vmatpush.msra.mxu0 %v107
    %1259 = vmatpush.msra.mxu0 %v106
    %1260 = vmatpush.msra.mxu0 %v105
    %1261 = vmatpush.msra.mxu0 %v104
    %1262 = vmatpush.msra.mxu0 %v103
    %1263 = vmatmul.f32.gmra.mxu0 %v1243
    %v1264 = vpop.f32.mrf.mxu0
    %v1265 = vadd.f32 %v99, %v1264
    %1266 = vmatmul.f32.gmra.mxu0 %v1244
    %v1267 = vpop.f32.mrf.mxu0
    %v1268 = vadd.f32 %v100, %v1267
    %1269 = vmatmul.f32.gmra.mxu0 %v1245
    %v1270 = vpop.f32.mrf.mxu0
    %v1271 = vadd.f32 %v101, %v1270
    %1272 = vmatmul.f32.gmra.mxu0 %v1246
    %v1273 = vpop.f32.mrf.mxu0
    %v1274 = vadd.f32 %v102, %v1273
    %1275 = vdwg.mxu0
    %v1276 = vtanh.pop %v1265
    %v1277 = vtanh.pop %v1268
    %v1278 = vtanh.pop %v1271
    %v1279 = vtanh.pop %v1274
    %v1280 = vmul.f32 %v1276, 0.020833334
    %v1281 = vmul.f32 %v1277, 0.020833334
    %v1282 = vmul.f32 %v1278, 0.020833334
    %v1283 = vmul.f32 %v1279, 0.020833334
    %v1284 = vadd.f32 %v1243, %v1280
    %v1285 = vadd.f32 %v1244, %v1281
    %v1286 = vadd.f32 %v1245, %v1282
    %v1287 = vadd.f32 %v1246, %v1283
    %v1288 = vmul.f32 %v1276, 0.0625
    %v1289 = vmul.f32 %v1277, 0.0625
    %v1290 = vmul.f32 %v1278, 0.0625
    %v1291 = vmul.f32 %v1279, 0.0625
    %v1292 = vadd.f32 %v1243, %v1288
    %v1293 = vadd.f32 %v1244, %v1289
    %v1294 = vadd.f32 %v1245, %v1290
    %v1295 = vadd.f32 %v1246, %v1291
    %1296 = vmatpush.msra.mxu0 %v118
    %1297 = vmatpush.msra.mxu0 %v117
    %1298 = vmatpush.msra.mxu0 %v116
    %1299 = vmatpush.msra.mxu0 %v115
    %1300 = vmatpush.msra.mxu0 %v114
    %1301 = vmatpush.msra.mxu0 %v113
    %1302 = vmatpush.msra.mxu0 %v112
    %1303 = vmatpush.msra.mxu0 %v111
    %1304 = vmatpush.msra.mxu0 %v110
    %1305 = vmatpush.msra.mxu0 %v109
    %1306 = vmatpush.msra.mxu0 %v108
    %1307 = vmatpush.msra.mxu0 %v107
    %1308 = vmatpush.msra.mxu0 %v106
    %1309 = vmatpush.msra.mxu0 %v105
    %1310 = vmatpush.msra.mxu0 %v104
    %1311 = vmatpush.msra.mxu0 %v103
    %1312 = vmatmul.f32.gmra.mxu0 %v1292
    %v1313 = vpop.f32.mrf.mxu0
    %v1314 = vadd.f32 %v99, %v1313
    %1315 = vmatmul.f32.gmra.mxu0 %v1293
    %v1316 = vpop.f32.mrf.mxu0
    %v1317 = vadd.f32 %v100, %v1316
    %1318 = vmatmul.f32.gmra.mxu0 %v1294
    %v1319 = vpop.f32.mrf.mxu0
    %v1320 = vadd.f32 %v101, %v1319
    %1321 = vmatmul.f32.gmra.mxu0 %v1295
    %v1322 = vpop.f32.mrf.mxu0
    %v1323 = vadd.f32 %v102, %v1322
    %1324 = vdwg.mxu0
    %v1325 = vtanh.pop %v1314
    %v1326 = vtanh.pop %v1317
    %v1327 = vtanh.pop %v1320
    %v1328 = vtanh.pop %v1323
    %v1329 = vmul.f32 %v1325, 0.041666668
    %v1330 = vmul.f32 %v1326, 0.041666668
    %v1331 = vmul.f32 %v1327, 0.041666668
    %v1332 = vmul.f32 %v1328, 0.041666668
    %v1333 = vadd.f32 %v1284, %v1329
    %v1334 = vadd.f32 %v1285, %v1330
    %v1335 = vadd.f32 %v1286, %v1331
    %v1336 = vadd.f32 %v1287, %v1332
    %v1337 = vmul.f32 %v1325, 0.0625
    %v1338 = vmul.f32 %v1326, 0.0625
    %v1339 = vmul.f32 %v1327, 0.0625
    %v1340 = vmul.f32 %v1328, 0.0625
    %v1341 = vadd.f32 %v1243, %v1337
    %v1342 = vadd.f32 %v1244, %v1338
    %v1343 = vadd.f32 %v1245, %v1339
    %v1344 = vadd.f32 %v1246, %v1340
    %1345 = vmatpush.msra.mxu0 %v118
    %1346 = vmatpush.msra.mxu0 %v117
    %1347 = vmatpush.msra.mxu0 %v116
    %1348 = vmatpush.msra.mxu0 %v115
    %1349 = vmatpush.msra.mxu0 %v114
    %1350 = vmatpush.msra.mxu0 %v113
    %1351 = vmatpush.msra.mxu0 %v112
    %1352 = vmatpush.msra.mxu0 %v111
    %1353 = vmatpush.msra.mxu0 %v110
    %1354 = vmatpush.msra.mxu0 %v109
    %1355 = vmatpush.msra.mxu0 %v108
    %1356 = vmatpush.msra.mxu0 %v107
    %1357 = vmatpush.msra.mxu0 %v106
    %1358 = vmatpush.msra.mxu0 %v105
    %1359 = vmatpush.msra.mxu0 %v104
    %1360 = vmatpush.msra.mxu0 %v103
    %1361 = vmatmul.f32.gmra.mxu0 %v1341
    %v1362 = vpop.f32.mrf.mxu0
    %v1363 = vadd.f32 %v99, %v1362
    %1364 = vmatmul.f32.gmra.mxu0 %v1342
    %v1365 = vpop.f32.mrf.mxu0
    %v1366 = vadd.f32 %v100, %v1365
    %1367 = vmatmul.f32.gmra.mxu0 %v1343
    %v1368 = vpop.f32.mrf.mxu0
    %v1369 = vadd.f32 %v101, %v1368
    %1370 = vmatmul.f32.gmra.mxu0 %v1344
    %v1371 = vpop.f32.mrf.mxu0
    %v1372 = vadd.f32 %v102, %v1371
    %1373 = vdwg.mxu0
    %v1374 = vtanh.pop %v1363
    %v1375 = vtanh.pop %v1366
    %v1376 = vtanh.pop %v1369
    %v1377 = vtanh.pop %v1372
    %v1378 = vmul.f32 %v1374, 0.041666668
    %v1379 = vmul.f32 %v1375, 0.041666668
    %v1380 = vmul.f32 %v1376, 0.041666668
    %v1381 = vmul.f32 %v1377, 0.041666668
    %v1382 = vadd.f32 %v1333, %v1378
    %v1383 = vadd.f32 %v1334, %v1379
    %v1384 = vadd.f32 %v1335, %v1380
    %v1385 = vadd.f32 %v1336, %v1381
    %v1386 = vmul.f32 %v1374, 0.125
    %v1387 = vmul.f32 %v1375, 0.125
    %v1388 = vmul.f32 %v1376, 0.125
    %v1389 = vmul.f32 %v1377, 0.125
    %v1390 = vadd.f32 %v1243, %v1386
    %v1391 = vadd.f32 %v1244, %v1387
    %v1392 = vadd.f32 %v1245, %v1388
    %v1393 = vadd.f32 %v1246, %v1389
    %1394 = vmatpush.msra.mxu0 %v118
    %1395 = vmatpush.msra.mxu0 %v117
    %1396 = vmatpush.msra.mxu0 %v116
    %1397 = vmatpush.msra.mxu0 %v115
    %1398 = vmatpush.msra.mxu0 %v114
    %1399 = vmatpush.msra.mxu0 %v113
    %1400 = vmatpush.msra.mxu0 %v112
    %1401 = vmatpush.msra.mxu0 %v111
    %1402 = vmatpush.msra.mxu0 %v110
    %1403 = vmatpush.msra.mxu0 %v109
    %1404 = vmatpush.msra.mxu0 %v108
    %1405 = vmatpush.msra.mxu0 %v107
    %1406 = vmatpush.msra.mxu0 %v106
    %1407 = vmatpush.msra.mxu0 %v105
    %1408 = vmatpush.msra.mxu0 %v104
    %1409 = vmatpush.msra.mxu0 %v103
    %1410 = vmatmul.f32.gmra.mxu0 %v1390
    %v1411 = vpop.f32.mrf.mxu0
    %v1412 = vadd.f32 %v99, %v1411
    %1413 = vmatmul.f32.gmra.mxu0 %v1391
    %v1414 = vpop.f32.mrf.mxu0
    %v1415 = vadd.f32 %v100, %v1414
    %1416 = vmatmul.f32.gmra.mxu0 %v1392
    %v1417 = vpop.f32.mrf.mxu0
    %v1418 = vadd.f32 %v101, %v1417
    %1419 = vmatmul.f32.gmra.mxu0 %v1393
    %v1420 = vpop.f32.mrf.mxu0
    %v1421 = vadd.f32 %v102, %v1420
    %1422 = vdwg.mxu0
    %v1423 = vtanh.pop %v1412
    %v1424 = vtanh.pop %v1415
    %v1425 = vtanh.pop %v1418
    %v1426 = vtanh.pop %v1421
    %v1427 = vmul.f32 %v1423, 0.020833334
    %v1428 = vmul.f32 %v1424, 0.020833334
    %v1429 = vmul.f32 %v1425, 0.020833334
    %v1430 = vmul.f32 %v1426, 0.020833334
    %v1431 = vadd.f32 %v1382, %v1427
    %v1432 = vadd.f32 %v1383, %v1428
    %v1433 = vadd.f32 %v1384, %v1429
    %v1434 = vadd.f32 %v1385, %v1430
    %1435 = vmatpush.msra.mxu0 %v118
    %1436 = vmatpush.msra.mxu0 %v117
    %1437 = vmatpush.msra.mxu0 %v116
    %1438 = vmatpush.msra.mxu0 %v115
    %1439 = vmatpush.msra.mxu0 %v114
    %1440 = vmatpush.msra.mxu0 %v113
    %1441 = vmatpush.msra.mxu0 %v112
    %1442 = vmatpush.msra.mxu0 %v111
    %1443 = vmatpush.msra.mxu0 %v110
    %1444 = vmatpush.msra.mxu0 %v109
    %1445 = vmatpush.msra.mxu0 %v108
    %1446 = vmatpush.msra.mxu0 %v107
    %1447 = vmatpush.msra.mxu0 %v106
    %1448 = vmatpush.msra.mxu0 %v105
    %1449 = vmatpush.msra.mxu0 %v104
    %1450 = vmatpush.msra.mxu0 %v103
    %1451 = vmatmul.f32.gmra.mxu0 %v1431
    %v1452 = vpop.f32.mrf.mxu0
    %v1453 = vadd.f32 %v99, %v1452
    %1454 = vmatmul.f32.gmra.mxu0 %v1432
    %v1455 = vpop.f32.mrf.mxu0
    %v1456 = vadd.f32 %v100, %v1455
    %1457 = vmatmul.f32.gmra.mxu0 %v1433
    %v1458 = vpop.f32.mrf.mxu0
    %v1459 = vadd.f32 %v101, %v1458
    %1460 = vmatmul.f32.gmra.mxu0 %v1434
    %v1461 = vpop.f32.mrf.mxu0
    %v1462 = vadd.f32 %v102, %v1461
    %1463 = vdwg.mxu0
    %v1464 = vtanh.pop %v1453
    %v1465 = vtanh.pop %v1456
    %v1466 = vtanh.pop %v1459
    %v1467 = vtanh.pop %v1462
    %v1468 = vmul.f32 %v1464, 0.020833334
    %v1469 = vmul.f32 %v1465, 0.020833334
    %v1470 = vmul.f32 %v1466, 0.020833334
    %v1471 = vmul.f32 %v1467, 0.020833334
    %v1472 = vadd.f32 %v1431, %v1468
    %v1473 = vadd.f32 %v1432, %v1469
    %v1474 = vadd.f32 %v1433, %v1470
    %v1475 = vadd.f32 %v1434, %v1471
    %v1476 = vmul.f32 %v1464, 0.0625
    %v1477 = vmul.f32 %v1465, 0.0625
    %v1478 = vmul.f32 %v1466, 0.0625
    %v1479 = vmul.f32 %v1467, 0.0625
    %v1480 = vadd.f32 %v1431, %v1476
    %v1481 = vadd.f32 %v1432, %v1477
    %v1482 = vadd.f32 %v1433, %v1478
    %v1483 = vadd.f32 %v1434, %v1479
    %1484 = vmatpush.msra.mxu0 %v118
    %1485 = vmatpush.msra.mxu0 %v117
    %1486 = vmatpush.msra.mxu0 %v116
    %1487 = vmatpush.msra.mxu0 %v115
    %1488 = vmatpush.msra.mxu0 %v114
    %1489 = vmatpush.msra.mxu0 %v113
    %1490 = vmatpush.msra.mxu0 %v112
    %1491 = vmatpush.msra.mxu0 %v111
    %1492 = vmatpush.msra.mxu0 %v110
    %1493 = vmatpush.msra.mxu0 %v109
    %1494 = vmatpush.msra.mxu0 %v108
    %1495 = vmatpush.msra.mxu0 %v107
    %1496 = vmatpush.msra.mxu0 %v106
    %1497 = vmatpush.msra.mxu0 %v105
    %1498 = vmatpush.msra.mxu0 %v104
    %1499 = vmatpush.msra.mxu0 %v103
    %1500 = vmatmul.f32.gmra.mxu0 %v1480
    %v1501 = vpop.f32.mrf.mxu0
    %v1502 = vadd.f32 %v99, %v1501
    %1503 = vmatmul.f32.gmra.mxu0 %v1481
    %v1504 = vpop.f32.mrf.mxu0
    %v1505 = vadd.f32 %v100, %v1504
    %1506 = vmatmul.f32.gmra.mxu0 %v1482
    %v1507 = vpop.f32.mrf.mxu0
    %v1508 = vadd.f32 %v101, %v1507
    %1509 = vmatmul.f32.gmra.mxu0 %v1483
    %v1510 = vpop.f32.mrf.mxu0
    %v1511 = vadd.f32 %v102, %v1510
    %1512 = vdwg.mxu0
    %v1513 = vtanh.pop %v1502
    %v1514 = vtanh.pop %v1505
    %v1515 = vtanh.pop %v1508
    %v1516 = vtanh.pop %v1511
    %v1517 = vmul.f32 %v1513, 0.041666668
    %v1518 = vmul.f32 %v1514, 0.041666668
    %v1519 = vmul.f32 %v1515, 0.041666668
    %v1520 = vmul.f32 %v1516, 0.041666668
    %v1521 = vadd.f32 %v1472, %v1517
    %v1522 = vadd.f32 %v1473, %v1518
    %v1523 = vadd.f32 %v1474, %v1519
    %v1524 = vadd.f32 %v1475, %v1520
    %v1525 = vmul.f32 %v1513, 0.0625
    %v1526 = vmul.f32 %v1514, 0.0625
    %v1527 = vmul.f32 %v1515, 0.0625
    %v1528 = vmul.f32 %v1516, 0.0625
    %v1529 = vadd.f32 %v1431, %v1525
    %v1530 = vadd.f32 %v1432, %v1526
    %v1531 = vadd.f32 %v1433, %v1527
    %v1532 = vadd.f32 %v1434, %v1528
    %1533 = vmatpush.msra.mxu0 %v118
    %1534 = vmatpush.msra.mxu0 %v117
    %1535 = vmatpush.msra.mxu0 %v116
    %1536 = vmatpush.msra.mxu0 %v115
    %1537 = vmatpush.msra.mxu0 %v114
    %1538 = vmatpush.msra.mxu0 %v113
    %1539 = vmatpush.msra.mxu0 %v112
    %1540 = vmatpush.msra.mxu0 %v111
    %1541 = vmatpush.msra.mxu0 %v110
    %1542 = vmatpush.msra.mxu0 %v109
    %1543 = vmatpush.msra.mxu0 %v108
    %1544 = vmatpush.msra.mxu0 %v107
    %1545 = vmatpush.msra.mxu0 %v106
    %1546 = vmatpush.msra.mxu0 %v105
    %1547 = vmatpush.msra.mxu0 %v104
    %1548 = vmatpush.msra.mxu0 %v103
    %1549 = vmatmul.f32.gmra.mxu0 %v1529
    %v1550 = vpop.f32.mrf.mxu0
    %v1551 = vadd.f32 %v99, %v1550
    %1552 = vmatmul.f32.gmra.mxu0 %v1530
    %v1553 = vpop.f32.mrf.mxu0
    %v1554 = vadd.f32 %v100, %v1553
    %1555 = vmatmul.f32.gmra.mxu0 %v1531
    %v1556 = vpop.f32.mrf.mxu0
    %v1557 = vadd.f32 %v101, %v1556
    %1558 = vmatmul.f32.gmra.mxu0 %v1532
    %v1559 = vpop.f32.mrf.mxu0
    %v1560 = vadd.f32 %v102, %v1559
    %1561 = vdwg.mxu0
    %v1562 = vtanh.pop %v1551
    %v1563 = vtanh.pop %v1554
    %v1564 = vtanh.pop %v1557
    %v1565 = vtanh.pop %v1560
    %v1566 = vmul.f32 %v1562, 0.041666668
    %v1567 = vmul.f32 %v1563, 0.041666668
    %v1568 = vmul.f32 %v1564, 0.041666668
    %v1569 = vmul.f32 %v1565, 0.041666668
    %v1570 = vadd.f32 %v1521, %v1566
    %v1571 = vadd.f32 %v1522, %v1567
    %v1572 = vadd.f32 %v1523, %v1568
    %v1573 = vadd.f32 %v1524, %v1569
    %v1574 = vmul.f32 %v1562, 0.125
    %v1575 = vmul.f32 %v1563, 0.125
    %v1576 = vmul.f32 %v1564, 0.125
    %v1577 = vmul.f32 %v1565, 0.125
    %v1578 = vadd.f32 %v1431, %v1574
    %v1579 = vadd.f32 %v1432, %v1575
    %v1580 = vadd.f32 %v1433, %v1576
    %v1581 = vadd.f32 %v1434, %v1577
    %1582 = vmatpush.msra.mxu0 %v118
    %1583 = vmatpush.msra.mxu0 %v117
    %1584 = vmatpush.msra.mxu0 %v116
    %1585 = vmatpush.msra.mxu0 %v115
    %1586 = vmatpush.msra.mxu0 %v114
    %1587 = vmatpush.msra.mxu0 %v113
    %1588 = vmatpush.msra.mxu0 %v112
    %1589 = vmatpush.msra.mxu0 %v111
    %1590 = vmatpush.msra.mxu0 %v110
    %1591 = vmatpush.msra.mxu0 %v109
    %1592 = vmatpush.msra.mxu0 %v108
    %1593 = vmatpush.msra.mxu0 %v107
    %1594 = vmatpush.msra.mxu0 %v106
    %1595 = vmatpush.msra.mxu0 %v105
    %1596 = vmatpush.msra.mxu0 %v104
    %1597 = vmatpush.msra.mxu0 %v103
    %1598 = vmatmul.f32.gmra.mxu0 %v1578
    %v1599 = vpop.f32.mrf.mxu0
    %v1600 = vadd.f32 %v99, %v1599
    %1601 = vmatmul.f32.gmra.mxu0 %v1579
    %v1602 = vpop.f32.mrf.mxu0
    %v1603 = vadd.f32 %v100, %v1602
    %1604 = vmatmul.f32.gmra.mxu0 %v1580
    %v1605 = vpop.f32.mrf.mxu0
    %v1606 = vadd.f32 %v101, %v1605
    %1607 = vmatmul.f32.gmra.mxu0 %v1581
    %v1608 = vpop.f32.mrf.mxu0
    %v1609 = vadd.f32 %v102, %v1608
    %1610 = vdwg.mxu0
    %v1611 = vtanh.pop %v1600
    %v1612 = vtanh.pop %v1603
    %v1613 = vtanh.pop %v1606
    %v1614 = vtanh.pop %v1609
    %v1615 = vmul.f32 %v1611, 0.020833334
    %v1616 = vmul.f32 %v1612, 0.020833334
    %v1617 = vmul.f32 %v1613, 0.020833334
    %v1618 = vmul.f32 %v1614, 0.020833334
    %v1619 = vadd.f32 %v1570, %v1615
    %v1620 = vadd.f32 %v1571, %v1616
    %v1621 = vadd.f32 %v1572, %v1617
    %v1622 = vadd.f32 %v1573, %v1618
    %s1623 = scalar_lea.vmem %s4, %s39
    %1624 = vst [vmem:[%s1623] sm:$0xff] %v1619
    %1625 = vst [vmem:[%s1623 + $0x8] sm:$0xff] %v1620
    %1626 = vst [vmem:[%s1623 + $0x10] sm:$0xff] %v1621
    %1627 = vst [vmem:[%s1623 + $0x18] sm:$0xff] %v1622
  $region26: #{ode_rnn_forward.1} parent=0 // loop_footer
    %s34 = sadd.s32 1, %s30
  $region27: #{ode_rnn_forward.1} parent=0 // loop_footer_branch
    %29 = sbr.rel target = $region23
  $region28: #{ode_rnn_forward.1} parent=0 // loop_exit
    _
  %1628 = vst [vmem:[#allocation2] sm:$0xff] %v35
  %1629 = vst [vmem:[#allocation2 + $0x8] sm:$0xff] %v36
  %1630 = vst [vmem:[#allocation2 + $0x10] sm:$0xff] %v37
  %1631 = vst [vmem:[#allocation2 + $0x18] sm:$0xff] %v38
  // Predicated region
  $region29: #{ode_rnn_forward.1} parent=0 // pred_check
    _
  $region30: #{ode_rnn_forward.1} parent=0 // pred_check_branch
    %1633 = sbr.rel (0) target = $region32
  $region31: #{ode_rnn_forward.1} parent=0 // pred_region
    _
  $region32: #{ode_rnn_forward.1} parent=0 // pred_fallthru
    _
  // Predicated region
  $region33: #{ode_rnn_forward.1} parent=0 // pred_check
    _
  $region34: #{ode_rnn_forward.1} parent=0 // pred_check_branch
    %1635 = sbr.rel (0) target = $region36
  $region35: #{ode_rnn_forward.1} parent=0 // pred_region
    _
  $region36: #{ode_rnn_forward.1} parent=0 // pred_fallthru
    _

</llo_original>
